<compile_context>
chip_gen: v7x
topology: tpu7x:2x2x1
jax: 0.10.0
libtpu: 0.0.40
codegen_flags: <defaults>
</compile_context>

<pallas_src>
import functools
import math

import jax
import jax.numpy as jnp
from jax import lax
from jax.experimental import pallas as pl
from jax.experimental.pallas import tpu as pltpu


def _attn_kernel(x_ref, wall_ref, bc_ref, o_ref, *,
                 batch: int, seq: int, heads: int, head_dim: int):
    """Single kernel invocation over the whole (flattened) problem.

    x_ref    : (B*S, E)        input tokens, batch flattened into rows
    wall_ref : (E, E + H*E)    [ blockdiag att-val | fused V/O per head ]
    bc_ref   : (1, E)          combined bias (bv @ Wop^T + bop)
    o_ref    : (B*S, E)        output
    """
    emb = heads * head_dim
    scale = 1.0 / math.sqrt(head_dim)

    x = x_ref[...]                                              # (B*S, E) f32
    bias = bc_ref[...]                                          # (1, E) hoisted once

    # Single lane-dense projection for everything:
    #   lanes [0:E)                   -> per-head attention-value projection
    #   lanes [E + h*E : E + (h+1)*E) -> fused value->output projection, head h
    proj = jnp.dot(x, wall_ref[...], preferred_element_type=jnp.float32)

    out_rows = []
    for b in range(batch):                                      # static unroll
        r0 = b * seq
        xb = x[r0:r0 + seq, :]                                  # (S, E)
        out_b = None
        for h in range(heads):                                  # static unroll
            lo = h * head_dim
            ah = proj[r0:r0 + seq, lo:lo + head_dim]            # (S, D)
            xh = xb[:, lo:lo + head_dim]                        # (S, D)
            # scores = (x_h @ w_h) @ x_h^T without materializing a transpose
            s = lax.dot_general(
                ah, xh,
                dimension_numbers=(((1,), (1,)), ((), ())),
                preferred_element_type=jnp.float32) * scale     # (S, S)
            # softmax over last axis (causal mask is a no-op -- see NOTE above)
            # TODO(synk): if masking were intended, apply
            #   s = jnp.where(mask == 0, -inf, s) here before the softmax.
            s = s - jnp.max(s, axis=-1, keepdims=True)
            p = jnp.exp(s)
            p = p * pl.reciprocal(jnp.sum(p, axis=-1, keepdims=True),
                                  approx=True)                  # (S, S)
            # per-head contribution with the output projection already folded
            vslice = proj[r0:r0 + seq, emb + h * emb:emb + (h + 1) * emb]
            contrib = jnp.dot(p, vslice, preferred_element_type=jnp.float32)
            out_b = contrib if out_b is None else out_b + contrib
        out_rows.append(out_b)

    out_full = out_rows[0] if batch == 1 else jnp.concatenate(out_rows, axis=0)
    # One bias broadcast, one store for the whole (B*S, E) slab.
    o_ref[...] = (out_full + bias).astype(o_ref.dtype)


def prepare_params(w_att_val, wv_weight, wv_bias, op_weight, op_bias):
    """Weight prep -- call ONCE at model init, not per forward call."""
    heads, D, _ = w_att_val.shape
    E = heads * D
    f32 = jnp.float32

    # nn.Linear computes x @ W.T + b -> pre-transpose.
    wv_wt = wv_weight.T.astype(f32)                             # (E, E)
    op_wt = op_weight.T.astype(f32)                             # (E, E)

    # Block-diagonal attention-value weight: (x @ w_bd)[:, hD:(h+1)D] == x_h @ w_h
    w_bd = jax.scipy.linalg.block_diag(
        *[w_att_val[h].astype(f32) for h in range(heads)])      # (E, E)

    # Fused per-head value->output weights, lane-concatenated: (E, H*E)
    w_vo_cat = jnp.concatenate(
        [wv_wt[:, h * D:(h + 1) * D] @ op_wt[h * D:(h + 1) * D, :]
         for h in range(heads)],
        axis=1)

    # One packed weight for the single lane-dense projection: (E, E + H*E)
    w_all = jnp.concatenate([w_bd, w_vo_cat], axis=1)

    # Combined bias: softmax rows sum to 1, so the wv bias commutes through p.
    b_c = (wv_bias.astype(f32) @ op_wt + op_bias.astype(f32)).reshape(1, E)

    # NOTE: casting w_all / x to bfloat16 would halve DMA bytes and avoid f32
    # MXU multi-pass on v5e, but is kept f32 for the tight reference tolerance.
    return w_all, b_c


@jax.jit
def text_att_val_mha(x, w_all, b_c):
    """x: (B, S, E) float32; (w_all, b_c) from prepare_params()."""
    B, S, E = x.shape
    heads = w_all.shape[1] // E - 1
    D = E // heads

    x2 = x.reshape(B * S, E).astype(jnp.float32)                # flatten batch

    kernel = functools.partial(_attn_kernel, batch=B, seq=S,
                               heads=heads, head_dim=D)

    vmem_spec = pl.BlockSpec(memory_space=pltpu.MemorySpace.VMEM)
    out2 = pl.pallas_call(
        kernel,
        out_shape=jax.ShapeDtypeStruct((B * S, E), x.dtype),
        in_specs=[vmem_spec, vmem_spec, vmem_spec],
        out_specs=vmem_spec,
    )(x2, w_all, b_c)
    return out2.reshape(B, S, E)


def _reference(x, w_att_val, wv_weight, wv_bias, op_weight, op_bias, *, heads):
    """Pure-JAX re-implementation of the PyTorch forward (mask is a no-op)."""
    B, S, E = x.shape
    D = E // heads
    x_h = x.reshape(B, S, heads, D).transpose(0, 2, 1, 3)          # (B,H,S,D)
    att = jnp.einsum('bhsd,hde->bhse', x_h, w_att_val)
    att = jnp.einsum('bhse,bhte->bhst', att, x_h) / math.sqrt(D)   # (B,H,S,S)
    att = jax.nn.softmax(att, axis=-1)
    vx = x @ wv_weight.T + wv_bias                                  # (B,S,E)
    vx = vx.reshape(B, S, heads, D).transpose(0, 2, 1, 3)           # (B,H,S,D)
    vx = jnp.einsum('bhst,bhtd->bhsd', att, vx)
    vx = vx.transpose(0, 2, 1, 3).reshape(B, S, E)
    return vx @ op_weight.T + op_bias


if __name__ == "__main__":
    # Config: text_token_embedding=32, text_transformer_heads=4, max_text_len=8
    B, S, E, H = 2, 8, 32, 4
    D = E // H

    key = jax.random.PRNGKey(0)
    k_x, k_wav, k_wvw, k_wvb, k_opw, k_opb = jax.random.split(key, 6)

    x = jax.random.normal(k_x, (B, S, E), dtype=jnp.float32)

    # kaiming_uniform_(a=0) on (H, D, D): bound = sqrt(6 / fan_in), fan_in = D*D
    bound = math.sqrt(6.0 / (D * D))
    w_att_val = jax.random.uniform(k_wav, (H, D, D), jnp.float32,
                                   minval=-bound, maxval=bound)
    # wv: normal(std = in_features**-0.5); bias ~ default Linear init
    wv_weight = jax.random.normal(k_wvw, (E, E), jnp.float32) * (E ** -0.5)
    wv_bias = jax.random.uniform(k_wvb, (E,), jnp.float32,
                                 minval=-1.0 / math.sqrt(E),
                                 maxval=1.0 / math.sqrt(E))
    # out_proj: normal(std = in_features**-0.5)
    op_weight = jax.random.normal(k_opw, (E, E), jnp.float32) * (E ** -0.5)
    op_bias = jax.random.uniform(k_opb, (E,), jnp.float32,
                                 minval=-1.0 / math.sqrt(E),
                                 maxval=1.0 / math.sqrt(E))

    # Weight prep once (out of the per-call hot path), then the jitted apply.
    w_all, b_c = prepare_params(w_att_val, wv_weight, wv_bias,
                                op_weight, op_bias)
    out = text_att_val_mha(x, w_all, b_c)
    out = jax.block_until_ready(out)

    ref = _reference(x, w_att_val, wv_weight, wv_bias,
                     op_weight, op_bias, heads=H)
    assert out.shape == (B, S, E)
    # Tolerance slightly relaxed vs exact f32 because the softmax denominator
    # uses the EUP approximate reciprocal (pl.reciprocal(approx=True)) and the
    # folded bias rides on those (rows sum to 1 +/- ~2^-12) probabilities.
    assert jnp.allclose(out, ref, atol=5e-3, rtol=5e-3), "mismatch vs reference"

    print("KERNEL_OK")
</pallas_src>

<mosaic_0001>
module attributes {stable_mosaic.version = 11 : i64} {
  func.func @_attn_kernel(%arg0: memref<16x32xf32, #tpu.memory_space<vmem>>, %arg1: memref<32x160xf32, #tpu.memory_space<vmem>>, %arg2: memref<1x32xf32, #tpu.memory_space<vmem>>, %arg3: memref<16x32xf32, #tpu.memory_space<vmem>>) attributes {dimension_semantics = [], scalar_prefetch = 0 : i64, scratch_operands = 0 : i64, tpu.core_type = #tpu.core_type<tc>} {
    %c0 = arith.constant 0 : index
    %c0_0 = arith.constant 0 : index
    %0 = vector.load %arg0[%c0, %c0_0] : memref<16x32xf32, #tpu.memory_space<vmem>>, vector<16x32xf32>
    %c0_1 = arith.constant 0 : index
    %c0_2 = arith.constant 0 : index
    %1 = vector.load %arg2[%c0_1, %c0_2] : memref<1x32xf32, #tpu.memory_space<vmem>>, vector<1x32xf32>
    %c0_3 = arith.constant 0 : index
    %c0_4 = arith.constant 0 : index
    %2 = vector.load %arg1[%c0_3, %c0_4] : memref<32x160xf32, #tpu.memory_space<vmem>>, vector<32x160xf32>
    %cst = arith.constant dense<0.000000e+00> : vector<16x160xf32>
    %3 = tpu.matmul %0, %2, %cst {dimension_numbers = #tpu.dot_dimension_numbers<[1], [0], [0], [1], [0, 0, 1, 1], [], []>} : vector<16x32xf32>, vector<32x160xf32>, vector<16x160xf32> -> vector<16x160xf32>
    %4 = vector.extract_strided_slice %0 {offsets = [0, 0], sizes = [8, 32], strides = [1, 1]} : vector<16x32xf32> to vector<8x32xf32>
    %5 = vector.extract_strided_slice %3 {offsets = [0, 0], sizes = [8, 8], strides = [1, 1]} : vector<16x160xf32> to vector<8x8xf32>
    %6 = vector.extract_strided_slice %4 {offsets = [0, 0], sizes = [8, 8], strides = [1, 1]} : vector<8x32xf32> to vector<8x8xf32>
    %cst_5 = arith.constant dense<0.000000e+00> : vector<8x8xf32>
    %7 = tpu.matmul %5, %6, %cst_5 {dimension_numbers = #tpu.dot_dimension_numbers<[1], [1], [0], [0], [0, 0, 1, 0], [], []>} : vector<8x8xf32>, vector<8x8xf32>, vector<8x8xf32> -> vector<8x8xf32>
    %cst_6 = arith.constant 0.353553385 : f32
    %8 = vector.broadcast %cst_6 : f32 to vector<8x8xf32>
    %9 = arith.mulf %7, %8 : vector<8x8xf32>
    %cst_7 = arith.constant dense<0xFF800000> : vector<8xf32>
    %10 = vector.multi_reduction <maximumf>, %9, %cst_7 [1] : vector<8x8xf32> to vector<8xf32>
    %11 = vector.shape_cast %10 : vector<8xf32> to vector<8x1xf32>
    %12 = vector.broadcast %11 : vector<8x1xf32> to vector<8x8xf32>
    %13 = arith.subf %9, %12 : vector<8x8xf32>
    %14 = math.exp %13 : vector<8x8xf32>
    %cst_8 = arith.constant dense<0.000000e+00> : vector<8xf32>
    %15 = vector.multi_reduction <add>, %14, %cst_8 [1] : vector<8x8xf32> to vector<8xf32>
    %16 = vector.shape_cast %15 : vector<8xf32> to vector<8x1xf32>
    %17 = tpu.reciprocal %16 {approx = true} : vector<8x1xf32> -> vector<8x1xf32>
    %18 = vector.broadcast %17 : vector<8x1xf32> to vector<8x8xf32>
    %19 = arith.mulf %14, %18 : vector<8x8xf32>
    %20 = vector.extract_strided_slice %3 {offsets = [0, 32], sizes = [8, 32], strides = [1, 1]} : vector<16x160xf32> to vector<8x32xf32>
    %cst_9 = arith.constant dense<0.000000e+00> : vector<8x32xf32>
    %21 = tpu.matmul %19, %20, %cst_9 {dimension_numbers = #tpu.dot_dimension_numbers<[1], [0], [0], [1], [0, 0, 1, 1], [], []>} : vector<8x8xf32>, vector<8x32xf32>, vector<8x32xf32> -> vector<8x32xf32>
    %22 = vector.extract_strided_slice %3 {offsets = [0, 8], sizes = [8, 8], strides = [1, 1]} : vector<16x160xf32> to vector<8x8xf32>
    %23 = vector.extract_strided_slice %4 {offsets = [0, 8], sizes = [8, 8], strides = [1, 1]} : vector<8x32xf32> to vector<8x8xf32>
    %cst_10 = arith.constant dense<0.000000e+00> : vector<8x8xf32>
    %24 = tpu.matmul %22, %23, %cst_10 {dimension_numbers = #tpu.dot_dimension_numbers<[1], [1], [0], [0], [0, 0, 1, 0], [], []>} : vector<8x8xf32>, vector<8x8xf32>, vector<8x8xf32> -> vector<8x8xf32>
    %cst_11 = arith.constant 0.353553385 : f32
    %25 = vector.broadcast %cst_11 : f32 to vector<8x8xf32>
    %26 = arith.mulf %24, %25 : vector<8x8xf32>
    %cst_12 = arith.constant dense<0xFF800000> : vector<8xf32>
    %27 = vector.multi_reduction <maximumf>, %26, %cst_12 [1] : vector<8x8xf32> to vector<8xf32>
    %28 = vector.shape_cast %27 : vector<8xf32> to vector<8x1xf32>
    %29 = vector.broadcast %28 : vector<8x1xf32> to vector<8x8xf32>
    %30 = arith.subf %26, %29 : vector<8x8xf32>
    %31 = math.exp %30 : vector<8x8xf32>
    %cst_13 = arith.constant dense<0.000000e+00> : vector<8xf32>
    %32 = vector.multi_reduction <add>, %31, %cst_13 [1] : vector<8x8xf32> to vector<8xf32>
    %33 = vector.shape_cast %32 : vector<8xf32> to vector<8x1xf32>
    %34 = tpu.reciprocal %33 {approx = true} : vector<8x1xf32> -> vector<8x1xf32>
    %35 = vector.broadcast %34 : vector<8x1xf32> to vector<8x8xf32>
    %36 = arith.mulf %31, %35 : vector<8x8xf32>
    %37 = vector.extract_strided_slice %3 {offsets = [0, 64], sizes = [8, 32], strides = [1, 1]} : vector<16x160xf32> to vector<8x32xf32>
    %cst_14 = arith.constant dense<0.000000e+00> : vector<8x32xf32>
    %38 = tpu.matmul %36, %37, %cst_14 {dimension_numbers = #tpu.dot_dimension_numbers<[1], [0], [0], [1], [0, 0, 1, 1], [], []>} : vector<8x8xf32>, vector<8x32xf32>, vector<8x32xf32> -> vector<8x32xf32>
    %39 = arith.addf %21, %38 : vector<8x32xf32>
    %40 = vector.extract_strided_slice %3 {offsets = [0, 16], sizes = [8, 8], strides = [1, 1]} : vector<16x160xf32> to vector<8x8xf32>
    %41 = vector.extract_strided_slice %4 {offsets = [0, 16], sizes = [8, 8], strides = [1, 1]} : vector<8x32xf32> to vector<8x8xf32>
    %cst_15 = arith.constant dense<0.000000e+00> : vector<8x8xf32>
    %42 = tpu.matmul %40, %41, %cst_15 {dimension_numbers = #tpu.dot_dimension_numbers<[1], [1], [0], [0], [0, 0, 1, 0], [], []>} : vector<8x8xf32>, vector<8x8xf32>, vector<8x8xf32> -> vector<8x8xf32>
    %cst_16 = arith.constant 0.353553385 : f32
    %43 = vector.broadcast %cst_16 : f32 to vector<8x8xf32>
    %44 = arith.mulf %42, %43 : vector<8x8xf32>
    %cst_17 = arith.constant dense<0xFF800000> : vector<8xf32>
    %45 = vector.multi_reduction <maximumf>, %44, %cst_17 [1] : vector<8x8xf32> to vector<8xf32>
    %46 = vector.shape_cast %45 : vector<8xf32> to vector<8x1xf32>
    %47 = vector.broadcast %46 : vector<8x1xf32> to vector<8x8xf32>
    %48 = arith.subf %44, %47 : vector<8x8xf32>
    %49 = math.exp %48 : vector<8x8xf32>
    %cst_18 = arith.constant dense<0.000000e+00> : vector<8xf32>
    %50 = vector.multi_reduction <add>, %49, %cst_18 [1] : vector<8x8xf32> to vector<8xf32>
    %51 = vector.shape_cast %50 : vector<8xf32> to vector<8x1xf32>
    %52 = tpu.reciprocal %51 {approx = true} : vector<8x1xf32> -> vector<8x1xf32>
    %53 = vector.broadcast %52 : vector<8x1xf32> to vector<8x8xf32>
    %54 = arith.mulf %49, %53 : vector<8x8xf32>
    %55 = vector.extract_strided_slice %3 {offsets = [0, 96], sizes = [8, 32], strides = [1, 1]} : vector<16x160xf32> to vector<8x32xf32>
    %cst_19 = arith.constant dense<0.000000e+00> : vector<8x32xf32>
    %56 = tpu.matmul %54, %55, %cst_19 {dimension_numbers = #tpu.dot_dimension_numbers<[1], [0], [0], [1], [0, 0, 1, 1], [], []>} : vector<8x8xf32>, vector<8x32xf32>, vector<8x32xf32> -> vector<8x32xf32>
    %57 = arith.addf %39, %56 : vector<8x32xf32>
    %58 = vector.extract_strided_slice %3 {offsets = [0, 24], sizes = [8, 8], strides = [1, 1]} : vector<16x160xf32> to vector<8x8xf32>
    %59 = vector.extract_strided_slice %4 {offsets = [0, 24], sizes = [8, 8], strides = [1, 1]} : vector<8x32xf32> to vector<8x8xf32>
    %cst_20 = arith.constant dense<0.000000e+00> : vector<8x8xf32>
    %60 = tpu.matmul %58, %59, %cst_20 {dimension_numbers = #tpu.dot_dimension_numbers<[1], [1], [0], [0], [0, 0, 1, 0], [], []>} : vector<8x8xf32>, vector<8x8xf32>, vector<8x8xf32> -> vector<8x8xf32>
    %cst_21 = arith.constant 0.353553385 : f32
    %61 = vector.broadcast %cst_21 : f32 to vector<8x8xf32>
    %62 = arith.mulf %60, %61 : vector<8x8xf32>
    %cst_22 = arith.constant dense<0xFF800000> : vector<8xf32>
    %63 = vector.multi_reduction <maximumf>, %62, %cst_22 [1] : vector<8x8xf32> to vector<8xf32>
    %64 = vector.shape_cast %63 : vector<8xf32> to vector<8x1xf32>
    %65 = vector.broadcast %64 : vector<8x1xf32> to vector<8x8xf32>
    %66 = arith.subf %62, %65 : vector<8x8xf32>
    %67 = math.exp %66 : vector<8x8xf32>
    %cst_23 = arith.constant dense<0.000000e+00> : vector<8xf32>
    %68 = vector.multi_reduction <add>, %67, %cst_23 [1] : vector<8x8xf32> to vector<8xf32>
    %69 = vector.shape_cast %68 : vector<8xf32> to vector<8x1xf32>
    %70 = tpu.reciprocal %69 {approx = true} : vector<8x1xf32> -> vector<8x1xf32>
    %71 = vector.broadcast %70 : vector<8x1xf32> to vector<8x8xf32>
    %72 = arith.mulf %67, %71 : vector<8x8xf32>
    %73 = vector.extract_strided_slice %3 {offsets = [0, 128], sizes = [8, 32], strides = [1, 1]} : vector<16x160xf32> to vector<8x32xf32>
    %cst_24 = arith.constant dense<0.000000e+00> : vector<8x32xf32>
    %74 = tpu.matmul %72, %73, %cst_24 {dimension_numbers = #tpu.dot_dimension_numbers<[1], [0], [0], [1], [0, 0, 1, 1], [], []>} : vector<8x8xf32>, vector<8x32xf32>, vector<8x32xf32> -> vector<8x32xf32>
    %75 = arith.addf %57, %74 : vector<8x32xf32>
    %76 = vector.extract_strided_slice %0 {offsets = [8, 0], sizes = [8, 32], strides = [1, 1]} : vector<16x32xf32> to vector<8x32xf32>
    %77 = vector.extract_strided_slice %3 {offsets = [8, 0], sizes = [8, 8], strides = [1, 1]} : vector<16x160xf32> to vector<8x8xf32>
    %78 = vector.extract_strided_slice %76 {offsets = [0, 0], sizes = [8, 8], strides = [1, 1]} : vector<8x32xf32> to vector<8x8xf32>
    %cst_25 = arith.constant dense<0.000000e+00> : vector<8x8xf32>
    %79 = tpu.matmul %77, %78, %cst_25 {dimension_numbers = #tpu.dot_dimension_numbers<[1], [1], [0], [0], [0, 0, 1, 0], [], []>} : vector<8x8xf32>, vector<8x8xf32>, vector<8x8xf32> -> vector<8x8xf32>
    %cst_26 = arith.constant 0.353553385 : f32
    %80 = vector.broadcast %cst_26 : f32 to vector<8x8xf32>
    %81 = arith.mulf %79, %80 : vector<8x8xf32>
    %cst_27 = arith.constant dense<0xFF800000> : vector<8xf32>
    %82 = vector.multi_reduction <maximumf>, %81, %cst_27 [1] : vector<8x8xf32> to vector<8xf32>
    %83 = vector.shape_cast %82 : vector<8xf32> to vector<8x1xf32>
    %84 = vector.broadcast %83 : vector<8x1xf32> to vector<8x8xf32>
    %85 = arith.subf %81, %84 : vector<8x8xf32>
    %86 = math.exp %85 : vector<8x8xf32>
    %cst_28 = arith.constant dense<0.000000e+00> : vector<8xf32>
    %87 = vector.multi_reduction <add>, %86, %cst_28 [1] : vector<8x8xf32> to vector<8xf32>
    %88 = vector.shape_cast %87 : vector<8xf32> to vector<8x1xf32>
    %89 = tpu.reciprocal %88 {approx = true} : vector<8x1xf32> -> vector<8x1xf32>
    %90 = vector.broadcast %89 : vector<8x1xf32> to vector<8x8xf32>
    %91 = arith.mulf %86, %90 : vector<8x8xf32>
    %92 = vector.extract_strided_slice %3 {offsets = [8, 32], sizes = [8, 32], strides = [1, 1]} : vector<16x160xf32> to vector<8x32xf32>
    %cst_29 = arith.constant dense<0.000000e+00> : vector<8x32xf32>
    %93 = tpu.matmul %91, %92, %cst_29 {dimension_numbers = #tpu.dot_dimension_numbers<[1], [0], [0], [1], [0, 0, 1, 1], [], []>} : vector<8x8xf32>, vector<8x32xf32>, vector<8x32xf32> -> vector<8x32xf32>
    %94 = vector.extract_strided_slice %3 {offsets = [8, 8], sizes = [8, 8], strides = [1, 1]} : vector<16x160xf32> to vector<8x8xf32>
    %95 = vector.extract_strided_slice %76 {offsets = [0, 8], sizes = [8, 8], strides = [1, 1]} : vector<8x32xf32> to vector<8x8xf32>
    %cst_30 = arith.constant dense<0.000000e+00> : vector<8x8xf32>
    %96 = tpu.matmul %94, %95, %cst_30 {dimension_numbers = #tpu.dot_dimension_numbers<[1], [1], [0], [0], [0, 0, 1, 0], [], []>} : vector<8x8xf32>, vector<8x8xf32>, vector<8x8xf32> -> vector<8x8xf32>
    %cst_31 = arith.constant 0.353553385 : f32
    %97 = vector.broadcast %cst_31 : f32 to vector<8x8xf32>
    %98 = arith.mulf %96, %97 : vector<8x8xf32>
    %cst_32 = arith.constant dense<0xFF800000> : vector<8xf32>
    %99 = vector.multi_reduction <maximumf>, %98, %cst_32 [1] : vector<8x8xf32> to vector<8xf32>
    %100 = vector.shape_cast %99 : vector<8xf32> to vector<8x1xf32>
    %101 = vector.broadcast %100 : vector<8x1xf32> to vector<8x8xf32>
    %102 = arith.subf %98, %101 : vector<8x8xf32>
    %103 = math.exp %102 : vector<8x8xf32>
    %cst_33 = arith.constant dense<0.000000e+00> : vector<8xf32>
    %104 = vector.multi_reduction <add>, %103, %cst_33 [1] : vector<8x8xf32> to vector<8xf32>
    %105 = vector.shape_cast %104 : vector<8xf32> to vector<8x1xf32>
    %106 = tpu.reciprocal %105 {approx = true} : vector<8x1xf32> -> vector<8x1xf32>
    %107 = vector.broadcast %106 : vector<8x1xf32> to vector<8x8xf32>
    %108 = arith.mulf %103, %107 : vector<8x8xf32>
    %109 = vector.extract_strided_slice %3 {offsets = [8, 64], sizes = [8, 32], strides = [1, 1]} : vector<16x160xf32> to vector<8x32xf32>
    %cst_34 = arith.constant dense<0.000000e+00> : vector<8x32xf32>
    %110 = tpu.matmul %108, %109, %cst_34 {dimension_numbers = #tpu.dot_dimension_numbers<[1], [0], [0], [1], [0, 0, 1, 1], [], []>} : vector<8x8xf32>, vector<8x32xf32>, vector<8x32xf32> -> vector<8x32xf32>
    %111 = arith.addf %93, %110 : vector<8x32xf32>
    %112 = vector.extract_strided_slice %3 {offsets = [8, 16], sizes = [8, 8], strides = [1, 1]} : vector<16x160xf32> to vector<8x8xf32>
    %113 = vector.extract_strided_slice %76 {offsets = [0, 16], sizes = [8, 8], strides = [1, 1]} : vector<8x32xf32> to vector<8x8xf32>
    %cst_35 = arith.constant dense<0.000000e+00> : vector<8x8xf32>
    %114 = tpu.matmul %112, %113, %cst_35 {dimension_numbers = #tpu.dot_dimension_numbers<[1], [1], [0], [0], [0, 0, 1, 0], [], []>} : vector<8x8xf32>, vector<8x8xf32>, vector<8x8xf32> -> vector<8x8xf32>
    %cst_36 = arith.constant 0.353553385 : f32
    %115 = vector.broadcast %cst_36 : f32 to vector<8x8xf32>
    %116 = arith.mulf %114, %115 : vector<8x8xf32>
    %cst_37 = arith.constant dense<0xFF800000> : vector<8xf32>
    %117 = vector.multi_reduction <maximumf>, %116, %cst_37 [1] : vector<8x8xf32> to vector<8xf32>
    %118 = vector.shape_cast %117 : vector<8xf32> to vector<8x1xf32>
    %119 = vector.broadcast %118 : vector<8x1xf32> to vector<8x8xf32>
    %120 = arith.subf %116, %119 : vector<8x8xf32>
    %121 = math.exp %120 : vector<8x8xf32>
    %cst_38 = arith.constant dense<0.000000e+00> : vector<8xf32>
    %122 = vector.multi_reduction <add>, %121, %cst_38 [1] : vector<8x8xf32> to vector<8xf32>
    %123 = vector.shape_cast %122 : vector<8xf32> to vector<8x1xf32>
    %124 = tpu.reciprocal %123 {approx = true} : vector<8x1xf32> -> vector<8x1xf32>
    %125 = vector.broadcast %124 : vector<8x1xf32> to vector<8x8xf32>
    %126 = arith.mulf %121, %125 : vector<8x8xf32>
    %127 = vector.extract_strided_slice %3 {offsets = [8, 96], sizes = [8, 32], strides = [1, 1]} : vector<16x160xf32> to vector<8x32xf32>
    %cst_39 = arith.constant dense<0.000000e+00> : vector<8x32xf32>
    %128 = tpu.matmul %126, %127, %cst_39 {dimension_numbers = #tpu.dot_dimension_numbers<[1], [0], [0], [1], [0, 0, 1, 1], [], []>} : vector<8x8xf32>, vector<8x32xf32>, vector<8x32xf32> -> vector<8x32xf32>
    %129 = arith.addf %111, %128 : vector<8x32xf32>
    %130 = vector.extract_strided_slice %3 {offsets = [8, 24], sizes = [8, 8], strides = [1, 1]} : vector<16x160xf32> to vector<8x8xf32>
    %131 = vector.extract_strided_slice %76 {offsets = [0, 24], sizes = [8, 8], strides = [1, 1]} : vector<8x32xf32> to vector<8x8xf32>
    %cst_40 = arith.constant dense<0.000000e+00> : vector<8x8xf32>
    %132 = tpu.matmul %130, %131, %cst_40 {dimension_numbers = #tpu.dot_dimension_numbers<[1], [1], [0], [0], [0, 0, 1, 0], [], []>} : vector<8x8xf32>, vector<8x8xf32>, vector<8x8xf32> -> vector<8x8xf32>
    %cst_41 = arith.constant 0.353553385 : f32
    %133 = vector.broadcast %cst_41 : f32 to vector<8x8xf32>
    %134 = arith.mulf %132, %133 : vector<8x8xf32>
    %cst_42 = arith.constant dense<0xFF800000> : vector<8xf32>
    %135 = vector.multi_reduction <maximumf>, %134, %cst_42 [1] : vector<8x8xf32> to vector<8xf32>
    %136 = vector.shape_cast %135 : vector<8xf32> to vector<8x1xf32>
    %137 = vector.broadcast %136 : vector<8x1xf32> to vector<8x8xf32>
    %138 = arith.subf %134, %137 : vector<8x8xf32>
    %139 = math.exp %138 : vector<8x8xf32>
    %cst_43 = arith.constant dense<0.000000e+00> : vector<8xf32>
    %140 = vector.multi_reduction <add>, %139, %cst_43 [1] : vector<8x8xf32> to vector<8xf32>
    %141 = vector.shape_cast %140 : vector<8xf32> to vector<8x1xf32>
    %142 = tpu.reciprocal %141 {approx = true} : vector<8x1xf32> -> vector<8x1xf32>
    %143 = vector.broadcast %142 : vector<8x1xf32> to vector<8x8xf32>
    %144 = arith.mulf %139, %143 : vector<8x8xf32>
    %145 = vector.extract_strided_slice %3 {offsets = [8, 128], sizes = [8, 32], strides = [1, 1]} : vector<16x160xf32> to vector<8x32xf32>
    %cst_44 = arith.constant dense<0.000000e+00> : vector<8x32xf32>
    %146 = tpu.matmul %144, %145, %cst_44 {dimension_numbers = #tpu.dot_dimension_numbers<[1], [0], [0], [1], [0, 0, 1, 1], [], []>} : vector<8x8xf32>, vector<8x32xf32>, vector<8x32xf32> -> vector<8x32xf32>
    %147 = arith.addf %129, %146 : vector<8x32xf32>
    %148 = tpu.concatenate %75, %147 in 0 : vector<8x32xf32>, vector<8x32xf32> -> vector<16x32xf32>
    %149 = vector.broadcast %1 : vector<1x32xf32> to vector<16x32xf32>
    %150 = arith.addf %148, %149 : vector<16x32xf32>
    %c0_45 = arith.constant 0 : index
    %c0_46 = arith.constant 0 : index
    %151 = vector.load %arg3[%c0_45, %c0_46] : memref<16x32xf32, #tpu.memory_space<vmem>>, vector<16x32xf32>
    tpu.vector_store %arg3[%c0_45, %c0_46], %150 {strides = array<i32>} : memref<16x32xf32, #tpu.memory_space<vmem>>, vector<16x32xf32>,
    return
  }
}

</mosaic_0001>

<llo_original>
// kernel: text_att_val_mha.1
$region0: #{text_att_val_mha.1}
  #allocation0 [shape = 'u32[]', space=smem, size = 0x4, offset = 0x4, fixed_abs, tag = 'smem constant byte address 0x4 - core index']
  #allocation1 [shape = 'u32[144,128]{1,0:T(1,128)}', space=vmem, size = 0x12000, scoped, tag = 'internal scratch']
  %s0 = inlined_call_operand.hbm [shape: f32[16,32], index: 0, kind: input, shape index: {}]
  %s1 = inlined_call_operand.hbm [shape: f32[32,160], index: 1, kind: input, shape index: {}]
  %s2 = inlined_call_operand.vmem [shape: f32[1,32], index: 2, kind: input, shape index: {}]
  %s3 = inlined_call_operand.hbm [shape: f32[16,32], index: 3, kind: output, shape index: {}]
  %s4 = sld [smem:[#allocation0]]
  $region30: #{text_att_val_mha.1} parent=0
    _
  %s6 = ssub.s32 1, %s4
  %s7 = scalar_select 0, %s6, %s4
  $region1: #{text_att_val_mha.1} parent=0
    #allocation2 [shape = 'u8[8192]{0}', space=vmem, size = 0x2000, scoped, tag = 'input window, operand 0, single buffered']
    #allocation3 [shape = 's32[1]{0}', space=sflag, size = 0x4, scoped, tag = 'scoped memory for text_att_val_mha.1']
    #allocation4 [shape = 's32[1]{0}', space=sflag, size = 0x4, scoped, tag = 'scoped memory for text_att_val_mha.1']
    #allocation5 [shape = 'u8[32768]{0}', space=vmem, size = 0x8000, scoped, tag = 'input window, operand 1, single buffered']
    #allocation6 [shape = 's32[1]{0}', space=sflag, size = 0x4, scoped, tag = 'scoped memory for text_att_val_mha.1']
    #allocation7 [shape = 'u8[8192]{0}', space=vmem, size = 0x2000, scoped, tag = 'output window, operand 0, single buffered']
    %8 = vsyncpa [#allocation3], 0
    %9 = vsyncpa [#allocation6], 0
    %10 = vsyncpa [#allocation4], 0
    // Predicated region
    $region2: #{text_att_val_mha.1} parent=1 // pred_check
      _
    $region3: #{text_att_val_mha.1} parent=1 // pred_check_branch
      %12 = sbr.rel (0) target = $region5
    $region4: #{text_att_val_mha.1} parent=1 // pred_region
      %s14 = ssub.s32 256, 256
      %15 = vsyncadd [#allocation3], %s14
      %s16 = sshll.u32 [#allocation2], 4
      %s17 = int_to_ptr.vmem [resolvable:$true] %s16
      %22 = dma.hbm_to_vmem [thread:$0]  %s0, 256, %s17, [#allocation3], 128, 128, 8
    $region5: #{text_att_val_mha.1} parent=1 // pred_fallthru
      _
    // Predicated region
    $region6: #{text_att_val_mha.1} parent=1 // pred_check
      _
    $region7: #{text_att_val_mha.1} parent=1 // pred_check_branch
      %24 = sbr.rel (0) target = $region9
    $region8: #{text_att_val_mha.1} parent=1 // pred_region
      %s26 = ssub.s32 1024, 1024
      %27 = vsyncadd [#allocation6], %s26
      %s28 = sshll.u32 [#allocation5], 4
      %s29 = int_to_ptr.vmem [resolvable:$true] %s28
      %34 = dma.hbm_to_vmem [thread:$0]  %s1, 1024, %s29, [#allocation6], 256, 256, 16
    $region9: #{text_att_val_mha.1} parent=1 // pred_fallthru
      _
    // Predicated region
    $region10: #{text_att_val_mha.1} parent=1 // pred_check
      _
    $region11: #{text_att_val_mha.1} parent=1 // pred_check_branch
      %36 = sbr.rel (0) target = $region13
    $region12: #{text_att_val_mha.1} parent=1 // pred_region
      _
    $region13: #{text_att_val_mha.1} parent=1 // pred_fallthru
      _
    // Predicated region
    $region14: #{text_att_val_mha.1} parent=1 // pred_check
      _
    $region15: #{text_att_val_mha.1} parent=1 // pred_check_branch
      %38 = sbr.rel (0) target = $region17
    $region16: #{text_att_val_mha.1} parent=1 // pred_region
      %39 = dma.done [#allocation3], 256
    $region17: #{text_att_val_mha.1} parent=1 // pred_fallthru
      _
    // Predicated region
    $region18: #{text_att_val_mha.1} parent=1 // pred_check
      _
    $region19: #{text_att_val_mha.1} parent=1 // pred_check_branch
      %41 = sbr.rel (0) target = $region21
    $region20: #{text_att_val_mha.1} parent=1 // pred_region
      %42 = dma.done [#allocation6], 1024
    $region21: #{text_att_val_mha.1} parent=1 // pred_fallthru
      _
    %v43 = vld [vmem:[#allocation2] sm:$0xff]
    %v44 = vld [vmem:[#allocation2 + $0x8] sm:$0xff]
    %v45 = vld [vmem:[%s2] sm:$0x1]
    %v46 = vld [vmem:[#allocation5] sm:$0xff]
    %v47 = vld [vmem:[#allocation5 + $0x8] sm:$0xff]
    %v48 = vld [vmem:[#allocation5 + $0x10] sm:$0xff]
    %v49 = vld [vmem:[#allocation5 + $0x18] sm:$0xff]
    %v50 = vld [vmem:[#allocation5 + $0x20] sm:$0xff]
    %v51 = vld [vmem:[#allocation5 + $0x28] sm:$0xff]
    %v52 = vld [vmem:[#allocation5 + $0x30] sm:$0xff]
    %v53 = vld [vmem:[#allocation5 + $0x38] sm:$0xff]
    %vm54 = vcmask 261120
    %v56 = vsel %vm54, %v43, 0
    %v59 = vsel %vm54, %v44, 0
    %61 = vmatprep.subr.mxu0 %v47
    %62 = vmatpush1.msra.mxu0 %v46
    %63 = vmatprep.subr.mxu0 %v49
    %64 = vmatpush1.msra.mxu0 %v48
    %65 = vmatprep.subr.mxu0 %v51
    %66 = vmatpush1.msra.mxu0 %v50
    %67 = vmatprep.subr.mxu0 %v53
    %68 = vmatpush1.msra.mxu0 %v52
    %69 = vmatprep.subr.mxu0 0.0
    %70 = vmatpush1.msra.mxu0 0.0
    %71 = vmatprep.subr.mxu0 0.0
    %72 = vmatpush1.msra.mxu0 0.0
    %73 = vmatprep.subr.mxu0 0.0
    %74 = vmatpush1.msra.mxu0 0.0
    %75 = vmatprep.subr.mxu0 0.0
    %76 = vmatpush1.msra.mxu0 0.0
    %77 = vmatprep.subr.mxu0 0.0
    %78 = vmatpush1.msra.mxu0 0.0
    %79 = vmatprep.subr.mxu0 0.0
    %80 = vmatpush1.msra.mxu0 0.0
    %81 = vmatprep.subr.mxu0 0.0
    %82 = vmatpush1.msra.mxu0 0.0
    %83 = vmatprep.subr.mxu0 0.0
    %84 = vmatpush1.msra.mxu0 0.0
    %85 = vmatprep.subr.mxu0 0.0
    %86 = vmatpush1.msra.mxu0 0.0
    %87 = vmatprep.subr.mxu0 0.0
    %88 = vmatpush1.msra.mxu0 0.0
    %89 = vmatprep.subr.mxu0 0.0
    %90 = vmatpush1.msra.mxu0 0.0
    %91 = vmatprep.subr.mxu0 0.0
    %92 = vmatpush1.msra.mxu0 0.0
    %93 = vmatprep.subr.mxu0 0.0
    %94 = vmatpush1.msra.mxu0 0.0
    %95 = vmatprep.subr.mxu0 0.0
    %96 = vmatpush1.msra.mxu0 0.0
    %97 = vmatprep.subr.mxu0 0.0
    %98 = vmatpush1.msra.mxu0 0.0
    %99 = vmatprep.subr.mxu0 0.0
    %100 = vmatpush1.msra.mxu0 0.0
    %101 = vmatprep.subr.mxu0 0.0
    %102 = vmatpush1.msra.mxu0 0.0
    %103 = vmatprep.subr.mxu0 0.0
    %104 = vmatpush1.msra.mxu0 0.0
    %105 = vmatprep.subr.mxu0 0.0
    %106 = vmatpush1.msra.mxu0 0.0
    %107 = vmatprep.subr.mxu0 0.0
    %108 = vmatpush1.msra.mxu0 0.0
    %109 = vmatprep.subr.mxu0 0.0
    %110 = vmatpush1.msra.mxu0 0.0
    %111 = vmatprep.subr.mxu0 0.0
    %112 = vmatpush1.msra.mxu0 0.0
    %113 = vmatprep.subr.mxu0 0.0
    %114 = vmatpush1.msra.mxu0 0.0
    %115 = vmatprep.subr.mxu0 0.0
    %116 = vmatpush1.msra.mxu0 0.0
    %117 = vmatprep.subr.mxu0 0.0
    %118 = vmatpush1.msra.mxu0 0.0
    %119 = vmatprep.subr.mxu0 0.0
    %120 = vmatpush1.msra.mxu0 0.0
    %121 = vmatprep.subr.mxu0 0.0
    %122 = vmatpush1.msra.mxu0 0.0
    %123 = vmatprep.subr.mxu0 0.0
    %124 = vmatpush1.msra.mxu0 0.0
    %125 = vmatprep.mubr.f32.mxu0 0.0
    %126 = vmatmul.mubr.f32.gmra.mrb[0].mxu0 %v56
    %v127 = vpop.f32.mrb[0].mxu0
    %v128 = vadd.f32 0.0, %v127
    %v129 = vpop.f32.mrb[0].mxu0
    %v130 = vadd.f32 0.0, %v129
    %131 = vmatprep.mubr.f32.mxu0 0.0
    %132 = vmatmul.mubr.f32.gmra.mrb[0].mxu0 %v59
    %v133 = vpop.f32.mrb[0].mxu0
    %v134 = vadd.f32 0.0, %v133
    %v135 = vpop.f32.mrb[0].mxu0
    %v136 = vadd.f32 0.0, %v135
    %137 = vdwg.mxu0
    %vm138 = vcmask 64512
    %v140 = vsel %vm138, %v128, 0
    %v142 = vsel %vm138, %v43, 0
    %144 = vmatprep.subr.mxu0 0.0
    %145 = vmatpush1.xpose.msra.mxu0 %v142
    %146 = vmatprep.subr.mxu0 0.0
    %147 = vmatpush1.xpose.msra.mxu0 0.0
    %148 = vmatprep.subr.mxu0 0.0
    %149 = vmatpush1.xpose.msra.mxu0 0.0
    %150 = vmatprep.subr.mxu0 0.0
    %151 = vmatpush1.xpose.msra.mxu0 0.0
    %152 = vmatprep.subr.mxu0 0.0
    %153 = vmatpush1.xpose.msra.mxu0 0.0
    %154 = vmatprep.subr.mxu0 0.0
    %155 = vmatpush1.xpose.msra.mxu0 0.0
    %156 = vmatprep.subr.mxu0 0.0
    %157 = vmatpush1.xpose.msra.mxu0 0.0
    %158 = vmatprep.subr.mxu0 0.0
    %159 = vmatpush1.xpose.msra.mxu0 0.0
    %160 = vmatprep.subr.mxu0 0.0
    %161 = vmatpush1.xpose.msra.mxu0 0.0
    %162 = vmatprep.subr.mxu0 0.0
    %163 = vmatpush1.xpose.msra.mxu0 0.0
    %164 = vmatprep.subr.mxu0 0.0
    %165 = vmatpush1.xpose.msra.mxu0 0.0
    %166 = vmatprep.subr.mxu0 0.0
    %167 = vmatpush1.xpose.msra.mxu0 0.0
    %168 = vmatprep.subr.mxu0 0.0
    %169 = vmatpush1.xpose.msra.mxu0 0.0
    %170 = vmatprep.subr.mxu0 0.0
    %171 = vmatpush1.xpose.msra.mxu0 0.0
    %172 = vmatprep.subr.mxu0 0.0
    %173 = vmatpush1.xpose.msra.mxu0 0.0
    %174 = vmatprep.subr.mxu0 0.0
    %175 = vmatpush1.xpose.msra.mxu0 0.0
    %176 = vmatprep.subr.mxu0 0.0
    %177 = vmatpush1.xpose.msra.mxu0 0.0
    %178 = vmatprep.subr.mxu0 0.0
    %179 = vmatpush1.xpose.msra.mxu0 0.0
    %180 = vmatprep.subr.mxu0 0.0
    %181 = vmatpush1.xpose.msra.mxu0 0.0
    %182 = vmatprep.subr.mxu0 0.0
    %183 = vmatpush1.xpose.msra.mxu0 0.0
    %184 = vmatprep.subr.mxu0 0.0
    %185 = vmatpush1.xpose.msra.mxu0 0.0
    %186 = vmatprep.subr.mxu0 0.0
    %187 = vmatpush1.xpose.msra.mxu0 0.0
    %188 = vmatprep.subr.mxu0 0.0
    %189 = vmatpush1.xpose.msra.mxu0 0.0
    %190 = vmatprep.subr.mxu0 0.0
    %191 = vmatpush1.xpose.msra.mxu0 0.0
    %192 = vmatprep.subr.mxu0 0.0
    %193 = vmatpush1.xpose.msra.mxu0 0.0
    %194 = vmatprep.subr.mxu0 0.0
    %195 = vmatpush1.xpose.msra.mxu0 0.0
    %196 = vmatprep.subr.mxu0 0.0
    %197 = vmatpush1.xpose.msra.mxu0 0.0
    %198 = vmatprep.subr.mxu0 0.0
    %199 = vmatpush1.xpose.msra.mxu0 0.0
    %200 = vmatprep.subr.mxu0 0.0
    %201 = vmatpush1.xpose.msra.mxu0 0.0
    %202 = vmatprep.subr.mxu0 0.0
    %203 = vmatpush1.xpose.msra.mxu0 0.0
    %204 = vmatprep.subr.mxu0 0.0
    %205 = vmatpush1.xpose.msra.mxu0 0.0
    %206 = vmatprep.subr.mxu0 0.0
    %207 = vmatpush1.xpose.msra.mxu0 0.0
    %208 = vmatprep.mubr.f32.mxu0 0.0
    %209 = vmatmul.mubr.f32.gmra.mrb[0].mxu0 %v140
    %v210 = vpop.f32.mrb[0].mxu0
    %v211 = vadd.f32 0.0, %v210
    %v212 = vpop.f32.mrb[0].mxu0
    %213 = vdwg.mxu0
    %v214 = vmul.f32 %v211, 0.35355338
    %v215 = vsel %vm138, %v214, -inf
    %216 = vmax.xlane.f32.xlu0 %v215
    %v217 = vpop.xlane.xlu0 %216
    %v218 = vsub.f32 %v214, %v217
    %v219 = vmul.f32 %v218, 1.442695
    %v220 = vpow.pop %v219
    %v221 = vsel %vm138, %v220, 0.0
    %222 = vadd.xlane.f32.xlu0 %v221
    %v223 = vpop.xlane.xlu0 %222
    %v224 = vrcp.pop %v223
    %v225 = vmul.f32 %v220, %v224
    %226 = vrot.lane.b32.xlu0 %v128, 120
    %v227 = vpop.permute.xlu0 %226
    %228 = vrot.lane.b32.xlu0 %v43, 120
    %v229 = vpop.permute.xlu0 %228
    %v230 = vsel %vm138, %v227, 0
    %v232 = vsel %vm138, %v229, 0
    %234 = vmatprep.subr.mxu0 0.0
    %235 = vmatpush1.xpose.msra.mxu0 %v232
    %236 = vmatprep.subr.mxu0 0.0
    %237 = vmatpush1.xpose.msra.mxu0 0.0
    %238 = vmatprep.subr.mxu0 0.0
    %239 = vmatpush1.xpose.msra.mxu0 0.0
    %240 = vmatprep.subr.mxu0 0.0
    %241 = vmatpush1.xpose.msra.mxu0 0.0
    %242 = vmatprep.subr.mxu0 0.0
    %243 = vmatpush1.xpose.msra.mxu0 0.0
    %244 = vmatprep.subr.mxu0 0.0
    %245 = vmatpush1.xpose.msra.mxu0 0.0
    %246 = vmatprep.subr.mxu0 0.0
    %247 = vmatpush1.xpose.msra.mxu0 0.0
    %248 = vmatprep.subr.mxu0 0.0
    %249 = vmatpush1.xpose.msra.mxu0 0.0
    %250 = vmatprep.subr.mxu0 0.0
    %251 = vmatpush1.xpose.msra.mxu0 0.0
    %252 = vmatprep.subr.mxu0 0.0
    %253 = vmatpush1.xpose.msra.mxu0 0.0
    %254 = vmatprep.subr.mxu0 0.0
    %255 = vmatpush1.xpose.msra.mxu0 0.0
    %256 = vmatprep.subr.mxu0 0.0
    %257 = vmatpush1.xpose.msra.mxu0 0.0
    %258 = vmatprep.subr.mxu0 0.0
    %259 = vmatpush1.xpose.msra.mxu0 0.0
    %260 = vmatprep.subr.mxu0 0.0
    %261 = vmatpush1.xpose.msra.mxu0 0.0
    %262 = vmatprep.subr.mxu0 0.0
    %263 = vmatpush1.xpose.msra.mxu0 0.0
    %264 = vmatprep.subr.mxu0 0.0
    %265 = vmatpush1.xpose.msra.mxu0 0.0
    %266 = vmatprep.subr.mxu0 0.0
    %267 = vmatpush1.xpose.msra.mxu0 0.0
    %268 = vmatprep.subr.mxu0 0.0
    %269 = vmatpush1.xpose.msra.mxu0 0.0
    %270 = vmatprep.subr.mxu0 0.0
    %271 = vmatpush1.xpose.msra.mxu0 0.0
    %272 = vmatprep.subr.mxu0 0.0
    %273 = vmatpush1.xpose.msra.mxu0 0.0
    %274 = vmatprep.subr.mxu0 0.0
    %275 = vmatpush1.xpose.msra.mxu0 0.0
    %276 = vmatprep.subr.mxu0 0.0
    %277 = vmatpush1.xpose.msra.mxu0 0.0
    %278 = vmatprep.subr.mxu0 0.0
    %279 = vmatpush1.xpose.msra.mxu0 0.0
    %280 = vmatprep.subr.mxu0 0.0
    %281 = vmatpush1.xpose.msra.mxu0 0.0
    %282 = vmatprep.subr.mxu0 0.0
    %283 = vmatpush1.xpose.msra.mxu0 0.0
    %284 = vmatprep.subr.mxu0 0.0
    %285 = vmatpush1.xpose.msra.mxu0 0.0
    %286 = vmatprep.subr.mxu0 0.0
    %287 = vmatpush1.xpose.msra.mxu0 0.0
    %288 = vmatprep.subr.mxu0 0.0
    %289 = vmatpush1.xpose.msra.mxu0 0.0
    %290 = vmatprep.subr.mxu0 0.0
    %291 = vmatpush1.xpose.msra.mxu0 0.0
    %292 = vmatprep.subr.mxu0 0.0
    %293 = vmatpush1.xpose.msra.mxu0 0.0
    %294 = vmatprep.subr.mxu0 0.0
    %295 = vmatpush1.xpose.msra.mxu0 0.0
    %296 = vmatprep.subr.mxu0 0.0
    %297 = vmatpush1.xpose.msra.mxu0 0.0
    %298 = vmatprep.mubr.f32.mxu0 0.0
    %299 = vmatmul.mubr.f32.gmra.mrb[0].mxu0 %v230
    %v300 = vpop.f32.mrb[0].mxu0
    %v301 = vadd.f32 0.0, %v300
    %v302 = vpop.f32.mrb[0].mxu0
    %303 = vdwg.mxu0
    %v304 = vmul.f32 %v301, 0.35355338
    %v305 = vsel %vm138, %v304, -inf
    %306 = vmax.xlane.f32.xlu0 %v305
    %v307 = vpop.xlane.xlu0 %306
    %v308 = vsub.f32 %v304, %v307
    %v309 = vmul.f32 %v308, 1.442695
    %v310 = vpow.pop %v309
    %v311 = vsel %vm138, %v310, 0.0
    %312 = vadd.xlane.f32.xlu0 %v311
    %v313 = vpop.xlane.xlu0 %312
    %v314 = vrcp.pop %v313
    %v315 = vmul.f32 %v310, %v314
    %316 = vrot.lane.b32.xlu0 %v128, 64
    %v317 = vpop.permute.xlu0 %316
    %v320 = vsel %vm138, %v315, 0
    %322 = vmatprep.subr.mxu0 0.0
    %323 = vmatpush1.msra.mxu0 %v317
    %324 = vmatprep.subr.mxu0 0.0
    %325 = vmatpush1.msra.mxu0 0.0
    %326 = vmatprep.subr.mxu0 0.0
    %327 = vmatpush1.msra.mxu0 0.0
    %328 = vmatprep.subr.mxu0 0.0
    %329 = vmatpush1.msra.mxu0 0.0
    %330 = vmatprep.subr.mxu0 0.0
    %331 = vmatpush1.msra.mxu0 0.0
    %332 = vmatprep.subr.mxu0 0.0
    %333 = vmatpush1.msra.mxu0 0.0
    %334 = vmatprep.subr.mxu0 0.0
    %335 = vmatpush1.msra.mxu0 0.0
    %336 = vmatprep.subr.mxu0 0.0
    %337 = vmatpush1.msra.mxu0 0.0
    %338 = vmatprep.subr.mxu0 0.0
    %339 = vmatpush1.msra.mxu0 0.0
    %340 = vmatprep.subr.mxu0 0.0
    %341 = vmatpush1.msra.mxu0 0.0
    %342 = vmatprep.subr.mxu0 0.0
    %343 = vmatpush1.msra.mxu0 0.0
    %344 = vmatprep.subr.mxu0 0.0
    %345 = vmatpush1.msra.mxu0 0.0
    %346 = vmatprep.subr.mxu0 0.0
    %347 = vmatpush1.msra.mxu0 0.0
    %348 = vmatprep.subr.mxu0 0.0
    %349 = vmatpush1.msra.mxu0 0.0
    %350 = vmatprep.subr.mxu0 0.0
    %351 = vmatpush1.msra.mxu0 0.0
    %352 = vmatprep.subr.mxu0 0.0
    %353 = vmatpush1.msra.mxu0 0.0
    %354 = vmatprep.subr.mxu0 0.0
    %355 = vmatpush1.msra.mxu0 0.0
    %356 = vmatprep.subr.mxu0 0.0
    %357 = vmatpush1.msra.mxu0 0.0
    %358 = vmatprep.subr.mxu0 0.0
    %359 = vmatpush1.msra.mxu0 0.0
    %360 = vmatprep.subr.mxu0 0.0
    %361 = vmatpush1.msra.mxu0 0.0
    %362 = vmatprep.subr.mxu0 0.0
    %363 = vmatpush1.msra.mxu0 0.0
    %364 = vmatprep.subr.mxu0 0.0
    %365 = vmatpush1.msra.mxu0 0.0
    %366 = vmatprep.subr.mxu0 0.0
    %367 = vmatpush1.msra.mxu0 0.0
    %368 = vmatprep.subr.mxu0 0.0
    %369 = vmatpush1.msra.mxu0 0.0
    %370 = vmatprep.subr.mxu0 0.0
    %371 = vmatpush1.msra.mxu0 0.0
    %372 = vmatprep.subr.mxu0 0.0
    %373 = vmatpush1.msra.mxu0 0.0
    %374 = vmatprep.subr.mxu0 0.0
    %375 = vmatpush1.msra.mxu0 0.0
    %376 = vmatprep.subr.mxu0 0.0
    %377 = vmatpush1.msra.mxu0 0.0
    %378 = vmatprep.subr.mxu0 0.0
    %379 = vmatpush1.msra.mxu0 0.0
    %380 = vmatprep.subr.mxu0 0.0
    %381 = vmatpush1.msra.mxu0 0.0
    %382 = vmatprep.subr.mxu0 0.0
    %383 = vmatpush1.msra.mxu0 0.0
    %384 = vmatprep.subr.mxu0 0.0
    %385 = vmatpush1.msra.mxu0 0.0
    %386 = vmatprep.mubr.f32.mxu0 0.0
    %387 = vmatmul.mubr.f32.gmra.mrb[0].mxu0 %v320
    %v388 = vpop.f32.mrb[0].mxu0
    %v389 = vadd.f32 0.0, %v388
    %v390 = vpop.f32.mrb[0].mxu0
    %391 = vdwg.mxu0
    %392 = vrot.lane.b32.xlu0 %v128, 96
    %v393 = vpop.permute.xlu0 %392
    %v396 = vsel %vm138, %v225, 0
    %398 = vmatprep.subr.mxu0 0.0
    %399 = vmatpush1.msra.mxu0 %v393
    %400 = vmatprep.subr.mxu0 0.0
    %401 = vmatpush1.msra.mxu0 0.0
    %402 = vmatprep.subr.mxu0 0.0
    %403 = vmatpush1.msra.mxu0 0.0
    %404 = vmatprep.subr.mxu0 0.0
    %405 = vmatpush1.msra.mxu0 0.0
    %406 = vmatprep.subr.mxu0 0.0
    %407 = vmatpush1.msra.mxu0 0.0
    %408 = vmatprep.subr.mxu0 0.0
    %409 = vmatpush1.msra.mxu0 0.0
    %410 = vmatprep.subr.mxu0 0.0
    %411 = vmatpush1.msra.mxu0 0.0
    %412 = vmatprep.subr.mxu0 0.0
    %413 = vmatpush1.msra.mxu0 0.0
    %414 = vmatprep.subr.mxu0 0.0
    %415 = vmatpush1.msra.mxu0 0.0
    %416 = vmatprep.subr.mxu0 0.0
    %417 = vmatpush1.msra.mxu0 0.0
    %418 = vmatprep.subr.mxu0 0.0
    %419 = vmatpush1.msra.mxu0 0.0
    %420 = vmatprep.subr.mxu0 0.0
    %421 = vmatpush1.msra.mxu0 0.0
    %422 = vmatprep.subr.mxu0 0.0
    %423 = vmatpush1.msra.mxu0 0.0
    %424 = vmatprep.subr.mxu0 0.0
    %425 = vmatpush1.msra.mxu0 0.0
    %426 = vmatprep.subr.mxu0 0.0
    %427 = vmatpush1.msra.mxu0 0.0
    %428 = vmatprep.subr.mxu0 0.0
    %429 = vmatpush1.msra.mxu0 0.0
    %430 = vmatprep.subr.mxu0 0.0
    %431 = vmatpush1.msra.mxu0 0.0
    %432 = vmatprep.subr.mxu0 0.0
    %433 = vmatpush1.msra.mxu0 0.0
    %434 = vmatprep.subr.mxu0 0.0
    %435 = vmatpush1.msra.mxu0 0.0
    %436 = vmatprep.subr.mxu0 0.0
    %437 = vmatpush1.msra.mxu0 0.0
    %438 = vmatprep.subr.mxu0 0.0
    %439 = vmatpush1.msra.mxu0 0.0
    %440 = vmatprep.subr.mxu0 0.0
    %441 = vmatpush1.msra.mxu0 0.0
    %442 = vmatprep.subr.mxu0 0.0
    %443 = vmatpush1.msra.mxu0 0.0
    %444 = vmatprep.subr.mxu0 0.0
    %445 = vmatpush1.msra.mxu0 0.0
    %446 = vmatprep.subr.mxu0 0.0
    %447 = vmatpush1.msra.mxu0 0.0
    %448 = vmatprep.subr.mxu0 0.0
    %449 = vmatpush1.msra.mxu0 0.0
    %450 = vmatprep.subr.mxu0 0.0
    %451 = vmatpush1.msra.mxu0 0.0
    %452 = vmatprep.subr.mxu0 0.0
    %453 = vmatpush1.msra.mxu0 0.0
    %454 = vmatprep.subr.mxu0 0.0
    %455 = vmatpush1.msra.mxu0 0.0
    %456 = vmatprep.subr.mxu0 0.0
    %457 = vmatpush1.msra.mxu0 0.0
    %458 = vmatprep.subr.mxu0 0.0
    %459 = vmatpush1.msra.mxu0 0.0
    %460 = vmatprep.subr.mxu0 0.0
    %461 = vmatpush1.msra.mxu0 0.0
    %462 = vmatprep.mubr.f32.mxu0 0.0
    %463 = vmatmul.mubr.f32.gmra.mrb[0].mxu0 %v396
    %v464 = vpop.f32.mrb[0].mxu0
    %v465 = vadd.f32 %v389, %v464
    %v466 = vpop.f32.mrb[0].mxu0
    %467 = vdwg.mxu0
    %468 = vrot.lane.b32.xlu0 %v128, 112
    %v469 = vpop.permute.xlu0 %468
    %470 = vrot.lane.b32.xlu0 %v43, 112
    %v471 = vpop.permute.xlu0 %470
    %v472 = vsel %vm138, %v469, 0
    %v474 = vsel %vm138, %v471, 0
    %476 = vmatprep.subr.mxu0 0.0
    %477 = vmatpush1.xpose.msra.mxu0 %v474
    %478 = vmatprep.subr.mxu0 0.0
    %479 = vmatpush1.xpose.msra.mxu0 0.0
    %480 = vmatprep.subr.mxu0 0.0
    %481 = vmatpush1.xpose.msra.mxu0 0.0
    %482 = vmatprep.subr.mxu0 0.0
    %483 = vmatpush1.xpose.msra.mxu0 0.0
    %484 = vmatprep.subr.mxu0 0.0
    %485 = vmatpush1.xpose.msra.mxu0 0.0
    %486 = vmatprep.subr.mxu0 0.0
    %487 = vmatpush1.xpose.msra.mxu0 0.0
    %488 = vmatprep.subr.mxu0 0.0
    %489 = vmatpush1.xpose.msra.mxu0 0.0
    %490 = vmatprep.subr.mxu0 0.0
    %491 = vmatpush1.xpose.msra.mxu0 0.0
    %492 = vmatprep.subr.mxu0 0.0
    %493 = vmatpush1.xpose.msra.mxu0 0.0
    %494 = vmatprep.subr.mxu0 0.0
    %495 = vmatpush1.xpose.msra.mxu0 0.0
    %496 = vmatprep.subr.mxu0 0.0
    %497 = vmatpush1.xpose.msra.mxu0 0.0
    %498 = vmatprep.subr.mxu0 0.0
    %499 = vmatpush1.xpose.msra.mxu0 0.0
    %500 = vmatprep.subr.mxu0 0.0
    %501 = vmatpush1.xpose.msra.mxu0 0.0
    %502 = vmatprep.subr.mxu0 0.0
    %503 = vmatpush1.xpose.msra.mxu0 0.0
    %504 = vmatprep.subr.mxu0 0.0
    %505 = vmatpush1.xpose.msra.mxu0 0.0
    %506 = vmatprep.subr.mxu0 0.0
    %507 = vmatpush1.xpose.msra.mxu0 0.0
    %508 = vmatprep.subr.mxu0 0.0
    %509 = vmatpush1.xpose.msra.mxu0 0.0
    %510 = vmatprep.subr.mxu0 0.0
    %511 = vmatpush1.xpose.msra.mxu0 0.0
    %512 = vmatprep.subr.mxu0 0.0
    %513 = vmatpush1.xpose.msra.mxu0 0.0
    %514 = vmatprep.subr.mxu0 0.0
    %515 = vmatpush1.xpose.msra.mxu0 0.0
    %516 = vmatprep.subr.mxu0 0.0
    %517 = vmatpush1.xpose.msra.mxu0 0.0
    %518 = vmatprep.subr.mxu0 0.0
    %519 = vmatpush1.xpose.msra.mxu0 0.0
    %520 = vmatprep.subr.mxu0 0.0
    %521 = vmatpush1.xpose.msra.mxu0 0.0
    %522 = vmatprep.subr.mxu0 0.0
    %523 = vmatpush1.xpose.msra.mxu0 0.0
    %524 = vmatprep.subr.mxu0 0.0
    %525 = vmatpush1.xpose.msra.mxu0 0.0
    %526 = vmatprep.subr.mxu0 0.0
    %527 = vmatpush1.xpose.msra.mxu0 0.0
    %528 = vmatprep.subr.mxu0 0.0
    %529 = vmatpush1.xpose.msra.mxu0 0.0
    %530 = vmatprep.subr.mxu0 0.0
    %531 = vmatpush1.xpose.msra.mxu0 0.0
    %532 = vmatprep.subr.mxu0 0.0
    %533 = vmatpush1.xpose.msra.mxu0 0.0
    %534 = vmatprep.subr.mxu0 0.0
    %535 = vmatpush1.xpose.msra.mxu0 0.0
    %536 = vmatprep.subr.mxu0 0.0
    %537 = vmatpush1.xpose.msra.mxu0 0.0
    %538 = vmatprep.subr.mxu0 0.0
    %539 = vmatpush1.xpose.msra.mxu0 0.0
    %540 = vmatprep.mubr.f32.mxu0 0.0
    %541 = vmatmul.mubr.f32.gmra.mrb[0].mxu0 %v472
    %v542 = vpop.f32.mrb[0].mxu0
    %v543 = vadd.f32 0.0, %v542
    %v544 = vpop.f32.mrb[0].mxu0
    %545 = vdwg.mxu0
    %v546 = vmul.f32 %v543, 0.35355338
    %v547 = vsel %vm138, %v546, -inf
    %548 = vmax.xlane.f32.xlu0 %v547
    %v549 = vpop.xlane.xlu0 %548
    %v550 = vsub.f32 %v546, %v549
    %v551 = vmul.f32 %v550, 1.442695
    %v552 = vpow.pop %v551
    %v553 = vsel %vm138, %v552, 0.0
    %554 = vadd.xlane.f32.xlu0 %v553
    %v555 = vpop.xlane.xlu0 %554
    %v556 = vrcp.pop %v555
    %v557 = vmul.f32 %v552, %v556
    %558 = vrot.lane.b32.xlu0 %v128, 32
    %v559 = vpop.permute.xlu0 %558
    %v562 = vsel %vm138, %v557, 0
    %564 = vmatprep.subr.mxu0 0.0
    %565 = vmatpush1.msra.mxu0 %v559
    %566 = vmatprep.subr.mxu0 0.0
    %567 = vmatpush1.msra.mxu0 0.0
    %568 = vmatprep.subr.mxu0 0.0
    %569 = vmatpush1.msra.mxu0 0.0
    %570 = vmatprep.subr.mxu0 0.0
    %571 = vmatpush1.msra.mxu0 0.0
    %572 = vmatprep.subr.mxu0 0.0
    %573 = vmatpush1.msra.mxu0 0.0
    %574 = vmatprep.subr.mxu0 0.0
    %575 = vmatpush1.msra.mxu0 0.0
    %576 = vmatprep.subr.mxu0 0.0
    %577 = vmatpush1.msra.mxu0 0.0
    %578 = vmatprep.subr.mxu0 0.0
    %579 = vmatpush1.msra.mxu0 0.0
    %580 = vmatprep.subr.mxu0 0.0
    %581 = vmatpush1.msra.mxu0 0.0
    %582 = vmatprep.subr.mxu0 0.0
    %583 = vmatpush1.msra.mxu0 0.0
    %584 = vmatprep.subr.mxu0 0.0
    %585 = vmatpush1.msra.mxu0 0.0
    %586 = vmatprep.subr.mxu0 0.0
    %587 = vmatpush1.msra.mxu0 0.0
    %588 = vmatprep.subr.mxu0 0.0
    %589 = vmatpush1.msra.mxu0 0.0
    %590 = vmatprep.subr.mxu0 0.0
    %591 = vmatpush1.msra.mxu0 0.0
    %592 = vmatprep.subr.mxu0 0.0
    %593 = vmatpush1.msra.mxu0 0.0
    %594 = vmatprep.subr.mxu0 0.0
    %595 = vmatpush1.msra.mxu0 0.0
    %596 = vmatprep.subr.mxu0 0.0
    %597 = vmatpush1.msra.mxu0 0.0
    %598 = vmatprep.subr.mxu0 0.0
    %599 = vmatpush1.msra.mxu0 0.0
    %600 = vmatprep.subr.mxu0 0.0
    %601 = vmatpush1.msra.mxu0 0.0
    %602 = vmatprep.subr.mxu0 0.0
    %603 = vmatpush1.msra.mxu0 0.0
    %604 = vmatprep.subr.mxu0 0.0
    %605 = vmatpush1.msra.mxu0 0.0
    %606 = vmatprep.subr.mxu0 0.0
    %607 = vmatpush1.msra.mxu0 0.0
    %608 = vmatprep.subr.mxu0 0.0
    %609 = vmatpush1.msra.mxu0 0.0
    %610 = vmatprep.subr.mxu0 0.0
    %611 = vmatpush1.msra.mxu0 0.0
    %612 = vmatprep.subr.mxu0 0.0
    %613 = vmatpush1.msra.mxu0 0.0
    %614 = vmatprep.subr.mxu0 0.0
    %615 = vmatpush1.msra.mxu0 0.0
    %616 = vmatprep.subr.mxu0 0.0
    %617 = vmatpush1.msra.mxu0 0.0
    %618 = vmatprep.subr.mxu0 0.0
    %619 = vmatpush1.msra.mxu0 0.0
    %620 = vmatprep.subr.mxu0 0.0
    %621 = vmatpush1.msra.mxu0 0.0
    %622 = vmatprep.subr.mxu0 0.0
    %623 = vmatpush1.msra.mxu0 0.0
    %624 = vmatprep.subr.mxu0 0.0
    %625 = vmatpush1.msra.mxu0 0.0
    %626 = vmatprep.subr.mxu0 0.0
    %627 = vmatpush1.msra.mxu0 0.0
    %628 = vmatprep.mubr.f32.mxu0 0.0
    %629 = vmatmul.mubr.f32.gmra.mrb[0].mxu0 %v562
    %v630 = vpop.f32.mrb[0].mxu0
    %v631 = vadd.f32 0.0, %v630
    %v632 = vpop.f32.mrb[0].mxu0
    %633 = vdwg.mxu0
    %v634 = vadd.f32 %v465, %v631
    %635 = vrot.lane.b32.xlu0 %v128, 104
    %v636 = vpop.permute.xlu0 %635
    %637 = vrot.lane.b32.xlu0 %v43, 104
    %v638 = vpop.permute.xlu0 %637
    %v639 = vsel %vm138, %v636, 0
    %v641 = vsel %vm138, %v638, 0
    %643 = vmatprep.subr.mxu0 0.0
    %644 = vmatpush1.xpose.msra.mxu0 %v641
    %645 = vmatprep.subr.mxu0 0.0
    %646 = vmatpush1.xpose.msra.mxu0 0.0
    %647 = vmatprep.subr.mxu0 0.0
    %648 = vmatpush1.xpose.msra.mxu0 0.0
    %649 = vmatprep.subr.mxu0 0.0
    %650 = vmatpush1.xpose.msra.mxu0 0.0
    %651 = vmatprep.subr.mxu0 0.0
    %652 = vmatpush1.xpose.msra.mxu0 0.0
    %653 = vmatprep.subr.mxu0 0.0
    %654 = vmatpush1.xpose.msra.mxu0 0.0
    %655 = vmatprep.subr.mxu0 0.0
    %656 = vmatpush1.xpose.msra.mxu0 0.0
    %657 = vmatprep.subr.mxu0 0.0
    %658 = vmatpush1.xpose.msra.mxu0 0.0
    %659 = vmatprep.subr.mxu0 0.0
    %660 = vmatpush1.xpose.msra.mxu0 0.0
    %661 = vmatprep.subr.mxu0 0.0
    %662 = vmatpush1.xpose.msra.mxu0 0.0
    %663 = vmatprep.subr.mxu0 0.0
    %664 = vmatpush1.xpose.msra.mxu0 0.0
    %665 = vmatprep.subr.mxu0 0.0
    %666 = vmatpush1.xpose.msra.mxu0 0.0
    %667 = vmatprep.subr.mxu0 0.0
    %668 = vmatpush1.xpose.msra.mxu0 0.0
    %669 = vmatprep.subr.mxu0 0.0
    %670 = vmatpush1.xpose.msra.mxu0 0.0
    %671 = vmatprep.subr.mxu0 0.0
    %672 = vmatpush1.xpose.msra.mxu0 0.0
    %673 = vmatprep.subr.mxu0 0.0
    %674 = vmatpush1.xpose.msra.mxu0 0.0
    %675 = vmatprep.subr.mxu0 0.0
    %676 = vmatpush1.xpose.msra.mxu0 0.0
    %677 = vmatprep.subr.mxu0 0.0
    %678 = vmatpush1.xpose.msra.mxu0 0.0
    %679 = vmatprep.subr.mxu0 0.0
    %680 = vmatpush1.xpose.msra.mxu0 0.0
    %681 = vmatprep.subr.mxu0 0.0
    %682 = vmatpush1.xpose.msra.mxu0 0.0
    %683 = vmatprep.subr.mxu0 0.0
    %684 = vmatpush1.xpose.msra.mxu0 0.0
    %685 = vmatprep.subr.mxu0 0.0
    %686 = vmatpush1.xpose.msra.mxu0 0.0
    %687 = vmatprep.subr.mxu0 0.0
    %688 = vmatpush1.xpose.msra.mxu0 0.0
    %689 = vmatprep.subr.mxu0 0.0
    %690 = vmatpush1.xpose.msra.mxu0 0.0
    %691 = vmatprep.subr.mxu0 0.0
    %692 = vmatpush1.xpose.msra.mxu0 0.0
    %693 = vmatprep.subr.mxu0 0.0
    %694 = vmatpush1.xpose.msra.mxu0 0.0
    %695 = vmatprep.subr.mxu0 0.0
    %696 = vmatpush1.xpose.msra.mxu0 0.0
    %697 = vmatprep.subr.mxu0 0.0
    %698 = vmatpush1.xpose.msra.mxu0 0.0
    %699 = vmatprep.subr.mxu0 0.0
    %700 = vmatpush1.xpose.msra.mxu0 0.0
    %701 = vmatprep.subr.mxu0 0.0
    %702 = vmatpush1.xpose.msra.mxu0 0.0
    %703 = vmatprep.subr.mxu0 0.0
    %704 = vmatpush1.xpose.msra.mxu0 0.0
    %705 = vmatprep.subr.mxu0 0.0
    %706 = vmatpush1.xpose.msra.mxu0 0.0
    %707 = vmatprep.mubr.f32.mxu0 0.0
    %708 = vmatmul.mubr.f32.gmra.mrb[0].mxu0 %v639
    %v709 = vpop.f32.mrb[0].mxu0
    %v710 = vadd.f32 0.0, %v709
    %v711 = vpop.f32.mrb[0].mxu0
    %712 = vdwg.mxu0
    %v713 = vmul.f32 %v710, 0.35355338
    %v714 = vsel %vm138, %v713, -inf
    %715 = vmax.xlane.f32.xlu0 %v714
    %v716 = vpop.xlane.xlu0 %715
    %v717 = vsub.f32 %v713, %v716
    %v718 = vmul.f32 %v717, 1.442695
    %v719 = vpow.pop %v718
    %v720 = vsel %vm138, %v719, 0.0
    %721 = vadd.xlane.f32.xlu0 %v720
    %v722 = vpop.xlane.xlu0 %721
    %v723 = vrcp.pop %v722
    %v724 = vmul.f32 %v719, %v723
    %v726 = vsel %vm138, %v724, 0
    %728 = vmatprep.subr.mxu0 0.0
    %729 = vmatpush1.msra.mxu0 %v130
    %730 = vmatprep.subr.mxu0 0.0
    %731 = vmatpush1.msra.mxu0 0.0
    %732 = vmatprep.subr.mxu0 0.0
    %733 = vmatpush1.msra.mxu0 0.0
    %734 = vmatprep.subr.mxu0 0.0
    %735 = vmatpush1.msra.mxu0 0.0
    %736 = vmatprep.subr.mxu0 0.0
    %737 = vmatpush1.msra.mxu0 0.0
    %738 = vmatprep.subr.mxu0 0.0
    %739 = vmatpush1.msra.mxu0 0.0
    %740 = vmatprep.subr.mxu0 0.0
    %741 = vmatpush1.msra.mxu0 0.0
    %742 = vmatprep.subr.mxu0 0.0
    %743 = vmatpush1.msra.mxu0 0.0
    %744 = vmatprep.subr.mxu0 0.0
    %745 = vmatpush1.msra.mxu0 0.0
    %746 = vmatprep.subr.mxu0 0.0
    %747 = vmatpush1.msra.mxu0 0.0
    %748 = vmatprep.subr.mxu0 0.0
    %749 = vmatpush1.msra.mxu0 0.0
    %750 = vmatprep.subr.mxu0 0.0
    %751 = vmatpush1.msra.mxu0 0.0
    %752 = vmatprep.subr.mxu0 0.0
    %753 = vmatpush1.msra.mxu0 0.0
    %754 = vmatprep.subr.mxu0 0.0
    %755 = vmatpush1.msra.mxu0 0.0
    %756 = vmatprep.subr.mxu0 0.0
    %757 = vmatpush1.msra.mxu0 0.0
    %758 = vmatprep.subr.mxu0 0.0
    %759 = vmatpush1.msra.mxu0 0.0
    %760 = vmatprep.subr.mxu0 0.0
    %761 = vmatpush1.msra.mxu0 0.0
    %762 = vmatprep.subr.mxu0 0.0
    %763 = vmatpush1.msra.mxu0 0.0
    %764 = vmatprep.subr.mxu0 0.0
    %765 = vmatpush1.msra.mxu0 0.0
    %766 = vmatprep.subr.mxu0 0.0
    %767 = vmatpush1.msra.mxu0 0.0
    %768 = vmatprep.subr.mxu0 0.0
    %769 = vmatpush1.msra.mxu0 0.0
    %770 = vmatprep.subr.mxu0 0.0
    %771 = vmatpush1.msra.mxu0 0.0
    %772 = vmatprep.subr.mxu0 0.0
    %773 = vmatpush1.msra.mxu0 0.0
    %774 = vmatprep.subr.mxu0 0.0
    %775 = vmatpush1.msra.mxu0 0.0
    %776 = vmatprep.subr.mxu0 0.0
    %777 = vmatpush1.msra.mxu0 0.0
    %778 = vmatprep.subr.mxu0 0.0
    %779 = vmatpush1.msra.mxu0 0.0
    %780 = vmatprep.subr.mxu0 0.0
    %781 = vmatpush1.msra.mxu0 0.0
    %782 = vmatprep.subr.mxu0 0.0
    %783 = vmatpush1.msra.mxu0 0.0
    %784 = vmatprep.subr.mxu0 0.0
    %785 = vmatpush1.msra.mxu0 0.0
    %786 = vmatprep.subr.mxu0 0.0
    %787 = vmatpush1.msra.mxu0 0.0
    %788 = vmatprep.subr.mxu0 0.0
    %789 = vmatpush1.msra.mxu0 0.0
    %790 = vmatprep.subr.mxu0 0.0
    %791 = vmatpush1.msra.mxu0 0.0
    %792 = vmatprep.mubr.f32.mxu0 0.0
    %793 = vmatmul.mubr.f32.gmra.mrb[0].mxu0 %v726
    %v794 = vpop.f32.mrb[0].mxu0
    %v795 = vadd.f32 0.0, %v794
    %v796 = vpop.f32.mrb[0].mxu0
    %797 = vdwg.mxu0
    %v798 = vadd.f32 %v634, %v795
    %v800 = vsel %vm138, %v134, 0
    %v802 = vsel %vm138, %v44, 0
    %804 = vmatprep.subr.mxu0 0.0
    %805 = vmatpush1.xpose.msra.mxu0 %v802
    %806 = vmatprep.subr.mxu0 0.0
    %807 = vmatpush1.xpose.msra.mxu0 0.0
    %808 = vmatprep.subr.mxu0 0.0
    %809 = vmatpush1.xpose.msra.mxu0 0.0
    %810 = vmatprep.subr.mxu0 0.0
    %811 = vmatpush1.xpose.msra.mxu0 0.0
    %812 = vmatprep.subr.mxu0 0.0
    %813 = vmatpush1.xpose.msra.mxu0 0.0
    %814 = vmatprep.subr.mxu0 0.0
    %815 = vmatpush1.xpose.msra.mxu0 0.0
    %816 = vmatprep.subr.mxu0 0.0
    %817 = vmatpush1.xpose.msra.mxu0 0.0
    %818 = vmatprep.subr.mxu0 0.0
    %819 = vmatpush1.xpose.msra.mxu0 0.0
    %820 = vmatprep.subr.mxu0 0.0
    %821 = vmatpush1.xpose.msra.mxu0 0.0
    %822 = vmatprep.subr.mxu0 0.0
    %823 = vmatpush1.xpose.msra.mxu0 0.0
    %824 = vmatprep.subr.mxu0 0.0
    %825 = vmatpush1.xpose.msra.mxu0 0.0
    %826 = vmatprep.subr.mxu0 0.0
    %827 = vmatpush1.xpose.msra.mxu0 0.0
    %828 = vmatprep.subr.mxu0 0.0
    %829 = vmatpush1.xpose.msra.mxu0 0.0
    %830 = vmatprep.subr.mxu0 0.0
    %831 = vmatpush1.xpose.msra.mxu0 0.0
    %832 = vmatprep.subr.mxu0 0.0
    %833 = vmatpush1.xpose.msra.mxu0 0.0
    %834 = vmatprep.subr.mxu0 0.0
    %835 = vmatpush1.xpose.msra.mxu0 0.0
    %836 = vmatprep.subr.mxu0 0.0
    %837 = vmatpush1.xpose.msra.mxu0 0.0
    %838 = vmatprep.subr.mxu0 0.0
    %839 = vmatpush1.xpose.msra.mxu0 0.0
    %840 = vmatprep.subr.mxu0 0.0
    %841 = vmatpush1.xpose.msra.mxu0 0.0
    %842 = vmatprep.subr.mxu0 0.0
    %843 = vmatpush1.xpose.msra.mxu0 0.0
    %844 = vmatprep.subr.mxu0 0.0
    %845 = vmatpush1.xpose.msra.mxu0 0.0
    %846 = vmatprep.subr.mxu0 0.0
    %847 = vmatpush1.xpose.msra.mxu0 0.0
    %848 = vmatprep.subr.mxu0 0.0
    %849 = vmatpush1.xpose.msra.mxu0 0.0
    %850 = vmatprep.subr.mxu0 0.0
    %851 = vmatpush1.xpose.msra.mxu0 0.0
    %852 = vmatprep.subr.mxu0 0.0
    %853 = vmatpush1.xpose.msra.mxu0 0.0
    %854 = vmatprep.subr.mxu0 0.0
    %855 = vmatpush1.xpose.msra.mxu0 0.0
    %856 = vmatprep.subr.mxu0 0.0
    %857 = vmatpush1.xpose.msra.mxu0 0.0
    %858 = vmatprep.subr.mxu0 0.0
    %859 = vmatpush1.xpose.msra.mxu0 0.0
    %860 = vmatprep.subr.mxu0 0.0
    %861 = vmatpush1.xpose.msra.mxu0 0.0
    %862 = vmatprep.subr.mxu0 0.0
    %863 = vmatpush1.xpose.msra.mxu0 0.0
    %864 = vmatprep.subr.mxu0 0.0
    %865 = vmatpush1.xpose.msra.mxu0 0.0
    %866 = vmatprep.subr.mxu0 0.0
    %867 = vmatpush1.xpose.msra.mxu0 0.0
    %868 = vmatprep.mubr.f32.mxu0 0.0
    %869 = vmatmul.mubr.f32.gmra.mrb[0].mxu0 %v800
    %v870 = vpop.f32.mrb[0].mxu0
    %v871 = vadd.f32 0.0, %v870
    %v872 = vpop.f32.mrb[0].mxu0
    %873 = vdwg.mxu0
    %v874 = vmul.f32 %v871, 0.35355338
    %v875 = vsel %vm138, %v874, -inf
    %876 = vmax.xlane.f32.xlu0 %v875
    %v877 = vpop.xlane.xlu0 %876
    %v878 = vsub.f32 %v874, %v877
    %v879 = vmul.f32 %v878, 1.442695
    %v880 = vpow.pop %v879
    %v881 = vsel %vm138, %v880, 0.0
    %882 = vadd.xlane.f32.xlu0 %v881
    %v883 = vpop.xlane.xlu0 %882
    %v884 = vrcp.pop %v883
    %v885 = vmul.f32 %v880, %v884
    %886 = vrot.lane.b32.xlu0 %v134, 120
    %v887 = vpop.permute.xlu0 %886
    %888 = vrot.lane.b32.xlu0 %v44, 120
    %v889 = vpop.permute.xlu0 %888
    %v890 = vsel %vm138, %v887, 0
    %v892 = vsel %vm138, %v889, 0
    %894 = vmatprep.subr.mxu0 0.0
    %895 = vmatpush1.xpose.msra.mxu0 %v892
    %896 = vmatprep.subr.mxu0 0.0
    %897 = vmatpush1.xpose.msra.mxu0 0.0
    %898 = vmatprep.subr.mxu0 0.0
    %899 = vmatpush1.xpose.msra.mxu0 0.0
    %900 = vmatprep.subr.mxu0 0.0
    %901 = vmatpush1.xpose.msra.mxu0 0.0
    %902 = vmatprep.subr.mxu0 0.0
    %903 = vmatpush1.xpose.msra.mxu0 0.0
    %904 = vmatprep.subr.mxu0 0.0
    %905 = vmatpush1.xpose.msra.mxu0 0.0
    %906 = vmatprep.subr.mxu0 0.0
    %907 = vmatpush1.xpose.msra.mxu0 0.0
    %908 = vmatprep.subr.mxu0 0.0
    %909 = vmatpush1.xpose.msra.mxu0 0.0
    %910 = vmatprep.subr.mxu0 0.0
    %911 = vmatpush1.xpose.msra.mxu0 0.0
    %912 = vmatprep.subr.mxu0 0.0
    %913 = vmatpush1.xpose.msra.mxu0 0.0
    %914 = vmatprep.subr.mxu0 0.0
    %915 = vmatpush1.xpose.msra.mxu0 0.0
    %916 = vmatprep.subr.mxu0 0.0
    %917 = vmatpush1.xpose.msra.mxu0 0.0
    %918 = vmatprep.subr.mxu0 0.0
    %919 = vmatpush1.xpose.msra.mxu0 0.0
    %920 = vmatprep.subr.mxu0 0.0
    %921 = vmatpush1.xpose.msra.mxu0 0.0
    %922 = vmatprep.subr.mxu0 0.0
    %923 = vmatpush1.xpose.msra.mxu0 0.0
    %924 = vmatprep.subr.mxu0 0.0
    %925 = vmatpush1.xpose.msra.mxu0 0.0
    %926 = vmatprep.subr.mxu0 0.0
    %927 = vmatpush1.xpose.msra.mxu0 0.0
    %928 = vmatprep.subr.mxu0 0.0
    %929 = vmatpush1.xpose.msra.mxu0 0.0
    %930 = vmatprep.subr.mxu0 0.0
    %931 = vmatpush1.xpose.msra.mxu0 0.0
    %932 = vmatprep.subr.mxu0 0.0
    %933 = vmatpush1.xpose.msra.mxu0 0.0
    %934 = vmatprep.subr.mxu0 0.0
    %935 = vmatpush1.xpose.msra.mxu0 0.0
    %936 = vmatprep.subr.mxu0 0.0
    %937 = vmatpush1.xpose.msra.mxu0 0.0
    %938 = vmatprep.subr.mxu0 0.0
    %939 = vmatpush1.xpose.msra.mxu0 0.0
    %940 = vmatprep.subr.mxu0 0.0
    %941 = vmatpush1.xpose.msra.mxu0 0.0
    %942 = vmatprep.subr.mxu0 0.0
    %943 = vmatpush1.xpose.msra.mxu0 0.0
    %944 = vmatprep.subr.mxu0 0.0
    %945 = vmatpush1.xpose.msra.mxu0 0.0
    %946 = vmatprep.subr.mxu0 0.0
    %947 = vmatpush1.xpose.msra.mxu0 0.0
    %948 = vmatprep.subr.mxu0 0.0
    %949 = vmatpush1.xpose.msra.mxu0 0.0
    %950 = vmatprep.subr.mxu0 0.0
    %951 = vmatpush1.xpose.msra.mxu0 0.0
    %952 = vmatprep.subr.mxu0 0.0
    %953 = vmatpush1.xpose.msra.mxu0 0.0
    %954 = vmatprep.subr.mxu0 0.0
    %955 = vmatpush1.xpose.msra.mxu0 0.0
    %956 = vmatprep.subr.mxu0 0.0
    %957 = vmatpush1.xpose.msra.mxu0 0.0
    %958 = vmatprep.mubr.f32.mxu0 0.0
    %959 = vmatmul.mubr.f32.gmra.mrb[0].mxu0 %v890
    %v960 = vpop.f32.mrb[0].mxu0
    %v961 = vadd.f32 0.0, %v960
    %v962 = vpop.f32.mrb[0].mxu0
    %963 = vdwg.mxu0
    %v964 = vmul.f32 %v961, 0.35355338
    %v965 = vsel %vm138, %v964, -inf
    %966 = vmax.xlane.f32.xlu0 %v965
    %v967 = vpop.xlane.xlu0 %966
    %v968 = vsub.f32 %v964, %v967
    %v969 = vmul.f32 %v968, 1.442695
    %v970 = vpow.pop %v969
    %v971 = vsel %vm138, %v970, 0.0
    %972 = vadd.xlane.f32.xlu0 %v971
    %v973 = vpop.xlane.xlu0 %972
    %v974 = vrcp.pop %v973
    %v975 = vmul.f32 %v970, %v974
    %976 = vrot.lane.b32.xlu0 %v134, 64
    %v977 = vpop.permute.xlu0 %976
    %v980 = vsel %vm138, %v975, 0
    %982 = vmatprep.subr.mxu0 0.0
    %983 = vmatpush1.msra.mxu0 %v977
    %984 = vmatprep.subr.mxu0 0.0
    %985 = vmatpush1.msra.mxu0 0.0
    %986 = vmatprep.subr.mxu0 0.0
    %987 = vmatpush1.msra.mxu0 0.0
    %988 = vmatprep.subr.mxu0 0.0
    %989 = vmatpush1.msra.mxu0 0.0
    %990 = vmatprep.subr.mxu0 0.0
    %991 = vmatpush1.msra.mxu0 0.0
    %992 = vmatprep.subr.mxu0 0.0
    %993 = vmatpush1.msra.mxu0 0.0
    %994 = vmatprep.subr.mxu0 0.0
    %995 = vmatpush1.msra.mxu0 0.0
    %996 = vmatprep.subr.mxu0 0.0
    %997 = vmatpush1.msra.mxu0 0.0
    %998 = vmatprep.subr.mxu0 0.0
    %999 = vmatpush1.msra.mxu0 0.0
    %1000 = vmatprep.subr.mxu0 0.0
    %1001 = vmatpush1.msra.mxu0 0.0
    %1002 = vmatprep.subr.mxu0 0.0
    %1003 = vmatpush1.msra.mxu0 0.0
    %1004 = vmatprep.subr.mxu0 0.0
    %1005 = vmatpush1.msra.mxu0 0.0
    %1006 = vmatprep.subr.mxu0 0.0
    %1007 = vmatpush1.msra.mxu0 0.0
    %1008 = vmatprep.subr.mxu0 0.0
    %1009 = vmatpush1.msra.mxu0 0.0
    %1010 = vmatprep.subr.mxu0 0.0
    %1011 = vmatpush1.msra.mxu0 0.0
    %1012 = vmatprep.subr.mxu0 0.0
    %1013 = vmatpush1.msra.mxu0 0.0
    %1014 = vmatprep.subr.mxu0 0.0
    %1015 = vmatpush1.msra.mxu0 0.0
    %1016 = vmatprep.subr.mxu0 0.0
    %1017 = vmatpush1.msra.mxu0 0.0
    %1018 = vmatprep.subr.mxu0 0.0
    %1019 = vmatpush1.msra.mxu0 0.0
    %1020 = vmatprep.subr.mxu0 0.0
    %1021 = vmatpush1.msra.mxu0 0.0
    %1022 = vmatprep.subr.mxu0 0.0
    %1023 = vmatpush1.msra.mxu0 0.0
    %1024 = vmatprep.subr.mxu0 0.0
    %1025 = vmatpush1.msra.mxu0 0.0
    %1026 = vmatprep.subr.mxu0 0.0
    %1027 = vmatpush1.msra.mxu0 0.0
    %1028 = vmatprep.subr.mxu0 0.0
    %1029 = vmatpush1.msra.mxu0 0.0
    %1030 = vmatprep.subr.mxu0 0.0
    %1031 = vmatpush1.msra.mxu0 0.0
    %1032 = vmatprep.subr.mxu0 0.0
    %1033 = vmatpush1.msra.mxu0 0.0
    %1034 = vmatprep.subr.mxu0 0.0
    %1035 = vmatpush1.msra.mxu0 0.0
    %1036 = vmatprep.subr.mxu0 0.0
    %1037 = vmatpush1.msra.mxu0 0.0
    %1038 = vmatprep.subr.mxu0 0.0
    %1039 = vmatpush1.msra.mxu0 0.0
    %1040 = vmatprep.subr.mxu0 0.0
    %1041 = vmatpush1.msra.mxu0 0.0
    %1042 = vmatprep.subr.mxu0 0.0
    %1043 = vmatpush1.msra.mxu0 0.0
    %1044 = vmatprep.subr.mxu0 0.0
    %1045 = vmatpush1.msra.mxu0 0.0
    %1046 = vmatprep.mubr.f32.mxu0 0.0
    %1047 = vmatmul.mubr.f32.gmra.mrb[0].mxu0 %v980
    %v1048 = vpop.f32.mrb[0].mxu0
    %v1049 = vadd.f32 0.0, %v1048
    %v1050 = vpop.f32.mrb[0].mxu0
    %1051 = vdwg.mxu0
    %1052 = vrot.lane.b32.xlu0 %v134, 96
    %v1053 = vpop.permute.xlu0 %1052
    %v1056 = vsel %vm138, %v885, 0
    %1058 = vmatprep.subr.mxu0 0.0
    %1059 = vmatpush1.msra.mxu0 %v1053
    %1060 = vmatprep.subr.mxu0 0.0
    %1061 = vmatpush1.msra.mxu0 0.0
    %1062 = vmatprep.subr.mxu0 0.0
    %1063 = vmatpush1.msra.mxu0 0.0
    %1064 = vmatprep.subr.mxu0 0.0
    %1065 = vmatpush1.msra.mxu0 0.0
    %1066 = vmatprep.subr.mxu0 0.0
    %1067 = vmatpush1.msra.mxu0 0.0
    %1068 = vmatprep.subr.mxu0 0.0
    %1069 = vmatpush1.msra.mxu0 0.0
    %1070 = vmatprep.subr.mxu0 0.0
    %1071 = vmatpush1.msra.mxu0 0.0
    %1072 = vmatprep.subr.mxu0 0.0
    %1073 = vmatpush1.msra.mxu0 0.0
    %1074 = vmatprep.subr.mxu0 0.0
    %1075 = vmatpush1.msra.mxu0 0.0
    %1076 = vmatprep.subr.mxu0 0.0
    %1077 = vmatpush1.msra.mxu0 0.0
    %1078 = vmatprep.subr.mxu0 0.0
    %1079 = vmatpush1.msra.mxu0 0.0
    %1080 = vmatprep.subr.mxu0 0.0
    %1081 = vmatpush1.msra.mxu0 0.0
    %1082 = vmatprep.subr.mxu0 0.0
    %1083 = vmatpush1.msra.mxu0 0.0
    %1084 = vmatprep.subr.mxu0 0.0
    %1085 = vmatpush1.msra.mxu0 0.0
    %1086 = vmatprep.subr.mxu0 0.0
    %1087 = vmatpush1.msra.mxu0 0.0
    %1088 = vmatprep.subr.mxu0 0.0
    %1089 = vmatpush1.msra.mxu0 0.0
    %1090 = vmatprep.subr.mxu0 0.0
    %1091 = vmatpush1.msra.mxu0 0.0
    %1092 = vmatprep.subr.mxu0 0.0
    %1093 = vmatpush1.msra.mxu0 0.0
    %1094 = vmatprep.subr.mxu0 0.0
    %1095 = vmatpush1.msra.mxu0 0.0
    %1096 = vmatprep.subr.mxu0 0.0
    %1097 = vmatpush1.msra.mxu0 0.0
    %1098 = vmatprep.subr.mxu0 0.0
    %1099 = vmatpush1.msra.mxu0 0.0
    %1100 = vmatprep.subr.mxu0 0.0
    %1101 = vmatpush1.msra.mxu0 0.0
    %1102 = vmatprep.subr.mxu0 0.0
    %1103 = vmatpush1.msra.mxu0 0.0
    %1104 = vmatprep.subr.mxu0 0.0
    %1105 = vmatpush1.msra.mxu0 0.0
    %1106 = vmatprep.subr.mxu0 0.0
    %1107 = vmatpush1.msra.mxu0 0.0
    %1108 = vmatprep.subr.mxu0 0.0
    %1109 = vmatpush1.msra.mxu0 0.0
    %1110 = vmatprep.subr.mxu0 0.0
    %1111 = vmatpush1.msra.mxu0 0.0
    %1112 = vmatprep.subr.mxu0 0.0
    %1113 = vmatpush1.msra.mxu0 0.0
    %1114 = vmatprep.subr.mxu0 0.0
    %1115 = vmatpush1.msra.mxu0 0.0
    %1116 = vmatprep.subr.mxu0 0.0
    %1117 = vmatpush1.msra.mxu0 0.0
    %1118 = vmatprep.subr.mxu0 0.0
    %1119 = vmatpush1.msra.mxu0 0.0
    %1120 = vmatprep.subr.mxu0 0.0
    %1121 = vmatpush1.msra.mxu0 0.0
    %1122 = vmatprep.mubr.f32.mxu0 0.0
    %1123 = vmatmul.mubr.f32.gmra.mrb[0].mxu0 %v1056
    %v1124 = vpop.f32.mrb[0].mxu0
    %v1125 = vadd.f32 %v1049, %v1124
    %v1126 = vpop.f32.mrb[0].mxu0
    %1127 = vdwg.mxu0
    %1128 = vrot.lane.b32.xlu0 %v134, 112
    %v1129 = vpop.permute.xlu0 %1128
    %1130 = vrot.lane.b32.xlu0 %v44, 112
    %v1131 = vpop.permute.xlu0 %1130
    %v1132 = vsel %vm138, %v1129, 0
    %v1134 = vsel %vm138, %v1131, 0
    %1136 = vmatprep.subr.mxu0 0.0
    %1137 = vmatpush1.xpose.msra.mxu0 %v1134
    %1138 = vmatprep.subr.mxu0 0.0
    %1139 = vmatpush1.xpose.msra.mxu0 0.0
    %1140 = vmatprep.subr.mxu0 0.0
    %1141 = vmatpush1.xpose.msra.mxu0 0.0
    %1142 = vmatprep.subr.mxu0 0.0
    %1143 = vmatpush1.xpose.msra.mxu0 0.0
    %1144 = vmatprep.subr.mxu0 0.0
    %1145 = vmatpush1.xpose.msra.mxu0 0.0
    %1146 = vmatprep.subr.mxu0 0.0
    %1147 = vmatpush1.xpose.msra.mxu0 0.0
    %1148 = vmatprep.subr.mxu0 0.0
    %1149 = vmatpush1.xpose.msra.mxu0 0.0
    %1150 = vmatprep.subr.mxu0 0.0
    %1151 = vmatpush1.xpose.msra.mxu0 0.0
    %1152 = vmatprep.subr.mxu0 0.0
    %1153 = vmatpush1.xpose.msra.mxu0 0.0
    %1154 = vmatprep.subr.mxu0 0.0
    %1155 = vmatpush1.xpose.msra.mxu0 0.0
    %1156 = vmatprep.subr.mxu0 0.0
    %1157 = vmatpush1.xpose.msra.mxu0 0.0
    %1158 = vmatprep.subr.mxu0 0.0
    %1159 = vmatpush1.xpose.msra.mxu0 0.0
    %1160 = vmatprep.subr.mxu0 0.0
    %1161 = vmatpush1.xpose.msra.mxu0 0.0
    %1162 = vmatprep.subr.mxu0 0.0
    %1163 = vmatpush1.xpose.msra.mxu0 0.0
    %1164 = vmatprep.subr.mxu0 0.0
    %1165 = vmatpush1.xpose.msra.mxu0 0.0
    %1166 = vmatprep.subr.mxu0 0.0
    %1167 = vmatpush1.xpose.msra.mxu0 0.0
    %1168 = vmatprep.subr.mxu0 0.0
    %1169 = vmatpush1.xpose.msra.mxu0 0.0
    %1170 = vmatprep.subr.mxu0 0.0
    %1171 = vmatpush1.xpose.msra.mxu0 0.0
    %1172 = vmatprep.subr.mxu0 0.0
    %1173 = vmatpush1.xpose.msra.mxu0 0.0
    %1174 = vmatprep.subr.mxu0 0.0
    %1175 = vmatpush1.xpose.msra.mxu0 0.0
    %1176 = vmatprep.subr.mxu0 0.0
    %1177 = vmatpush1.xpose.msra.mxu0 0.0
    %1178 = vmatprep.subr.mxu0 0.0
    %1179 = vmatpush1.xpose.msra.mxu0 0.0
    %1180 = vmatprep.subr.mxu0 0.0
    %1181 = vmatpush1.xpose.msra.mxu0 0.0
    %1182 = vmatprep.subr.mxu0 0.0
    %1183 = vmatpush1.xpose.msra.mxu0 0.0
    %1184 = vmatprep.subr.mxu0 0.0
    %1185 = vmatpush1.xpose.msra.mxu0 0.0
    %1186 = vmatprep.subr.mxu0 0.0
    %1187 = vmatpush1.xpose.msra.mxu0 0.0
    %1188 = vmatprep.subr.mxu0 0.0
    %1189 = vmatpush1.xpose.msra.mxu0 0.0
    %1190 = vmatprep.subr.mxu0 0.0
    %1191 = vmatpush1.xpose.msra.mxu0 0.0
    %1192 = vmatprep.subr.mxu0 0.0
    %1193 = vmatpush1.xpose.msra.mxu0 0.0
    %1194 = vmatprep.subr.mxu0 0.0
    %1195 = vmatpush1.xpose.msra.mxu0 0.0
    %1196 = vmatprep.subr.mxu0 0.0
    %1197 = vmatpush1.xpose.msra.mxu0 0.0
    %1198 = vmatprep.subr.mxu0 0.0
    %1199 = vmatpush1.xpose.msra.mxu0 0.0
    %1200 = vmatprep.mubr.f32.mxu0 0.0
    %1201 = vmatmul.mubr.f32.gmra.mrb[0].mxu0 %v1132
    %v1202 = vpop.f32.mrb[0].mxu0
    %v1203 = vadd.f32 0.0, %v1202
    %v1204 = vpop.f32.mrb[0].mxu0
    %1205 = vdwg.mxu0
    %v1206 = vmul.f32 %v1203, 0.35355338
    %v1207 = vsel %vm138, %v1206, -inf
    %1208 = vmax.xlane.f32.xlu0 %v1207
    %v1209 = vpop.xlane.xlu0 %1208
    %v1210 = vsub.f32 %v1206, %v1209
    %v1211 = vmul.f32 %v1210, 1.442695
    %v1212 = vpow.pop %v1211
    %v1213 = vsel %vm138, %v1212, 0.0
    %1214 = vadd.xlane.f32.xlu0 %v1213
    %v1215 = vpop.xlane.xlu0 %1214
    %v1216 = vrcp.pop %v1215
    %v1217 = vmul.f32 %v1212, %v1216
    %1218 = vrot.lane.b32.xlu0 %v134, 32
    %v1219 = vpop.permute.xlu0 %1218
    %v1222 = vsel %vm138, %v1217, 0
    %1224 = vmatprep.subr.mxu0 0.0
    %1225 = vmatpush1.msra.mxu0 %v1219
    %1226 = vmatprep.subr.mxu0 0.0
    %1227 = vmatpush1.msra.mxu0 0.0
    %1228 = vmatprep.subr.mxu0 0.0
    %1229 = vmatpush1.msra.mxu0 0.0
    %1230 = vmatprep.subr.mxu0 0.0
    %1231 = vmatpush1.msra.mxu0 0.0
    %1232 = vmatprep.subr.mxu0 0.0
    %1233 = vmatpush1.msra.mxu0 0.0
    %1234 = vmatprep.subr.mxu0 0.0
    %1235 = vmatpush1.msra.mxu0 0.0
    %1236 = vmatprep.subr.mxu0 0.0
    %1237 = vmatpush1.msra.mxu0 0.0
    %1238 = vmatprep.subr.mxu0 0.0
    %1239 = vmatpush1.msra.mxu0 0.0
    %1240 = vmatprep.subr.mxu0 0.0
    %1241 = vmatpush1.msra.mxu0 0.0
    %1242 = vmatprep.subr.mxu0 0.0
    %1243 = vmatpush1.msra.mxu0 0.0
    %1244 = vmatprep.subr.mxu0 0.0
    %1245 = vmatpush1.msra.mxu0 0.0
    %1246 = vmatprep.subr.mxu0 0.0
    %1247 = vmatpush1.msra.mxu0 0.0
    %1248 = vmatprep.subr.mxu0 0.0
    %1249 = vmatpush1.msra.mxu0 0.0
    %1250 = vmatprep.subr.mxu0 0.0
    %1251 = vmatpush1.msra.mxu0 0.0
    %1252 = vmatprep.subr.mxu0 0.0
    %1253 = vmatpush1.msra.mxu0 0.0
    %1254 = vmatprep.subr.mxu0 0.0
    %1255 = vmatpush1.msra.mxu0 0.0
    %1256 = vmatprep.subr.mxu0 0.0
    %1257 = vmatpush1.msra.mxu0 0.0
    %1258 = vmatprep.subr.mxu0 0.0
    %1259 = vmatpush1.msra.mxu0 0.0
    %1260 = vmatprep.subr.mxu0 0.0
    %1261 = vmatpush1.msra.mxu0 0.0
    %1262 = vmatprep.subr.mxu0 0.0
    %1263 = vmatpush1.msra.mxu0 0.0
    %1264 = vmatprep.subr.mxu0 0.0
    %1265 = vmatpush1.msra.mxu0 0.0
    %1266 = vmatprep.subr.mxu0 0.0
    %1267 = vmatpush1.msra.mxu0 0.0
    %1268 = vmatprep.subr.mxu0 0.0
    %1269 = vmatpush1.msra.mxu0 0.0
    %1270 = vmatprep.subr.mxu0 0.0
    %1271 = vmatpush1.msra.mxu0 0.0
    %1272 = vmatprep.subr.mxu0 0.0
    %1273 = vmatpush1.msra.mxu0 0.0
    %1274 = vmatprep.subr.mxu0 0.0
    %1275 = vmatpush1.msra.mxu0 0.0
    %1276 = vmatprep.subr.mxu0 0.0
    %1277 = vmatpush1.msra.mxu0 0.0
    %1278 = vmatprep.subr.mxu0 0.0
    %1279 = vmatpush1.msra.mxu0 0.0
    %1280 = vmatprep.subr.mxu0 0.0
    %1281 = vmatpush1.msra.mxu0 0.0
    %1282 = vmatprep.subr.mxu0 0.0
    %1283 = vmatpush1.msra.mxu0 0.0
    %1284 = vmatprep.subr.mxu0 0.0
    %1285 = vmatpush1.msra.mxu0 0.0
    %1286 = vmatprep.subr.mxu0 0.0
    %1287 = vmatpush1.msra.mxu0 0.0
    %1288 = vmatprep.mubr.f32.mxu0 0.0
    %1289 = vmatmul.mubr.f32.gmra.mrb[0].mxu0 %v1222
    %v1290 = vpop.f32.mrb[0].mxu0
    %v1291 = vadd.f32 0.0, %v1290
    %v1292 = vpop.f32.mrb[0].mxu0
    %1293 = vdwg.mxu0
    %v1294 = vadd.f32 %v1125, %v1291
    %1295 = vrot.lane.b32.xlu0 %v134, 104
    %v1296 = vpop.permute.xlu0 %1295
    %1297 = vrot.lane.b32.xlu0 %v44, 104
    %v1298 = vpop.permute.xlu0 %1297
    %v1299 = vsel %vm138, %v1296, 0
    %v1301 = vsel %vm138, %v1298, 0
    %1303 = vmatprep.subr.mxu0 0.0
    %1304 = vmatpush1.xpose.msra.mxu0 %v1301
    %1305 = vmatprep.subr.mxu0 0.0
    %1306 = vmatpush1.xpose.msra.mxu0 0.0
    %1307 = vmatprep.subr.mxu0 0.0
    %1308 = vmatpush1.xpose.msra.mxu0 0.0
    %1309 = vmatprep.subr.mxu0 0.0
    %1310 = vmatpush1.xpose.msra.mxu0 0.0
    %1311 = vmatprep.subr.mxu0 0.0
    %1312 = vmatpush1.xpose.msra.mxu0 0.0
    %1313 = vmatprep.subr.mxu0 0.0
    %1314 = vmatpush1.xpose.msra.mxu0 0.0
    %1315 = vmatprep.subr.mxu0 0.0
    %1316 = vmatpush1.xpose.msra.mxu0 0.0
    %1317 = vmatprep.subr.mxu0 0.0
    %1318 = vmatpush1.xpose.msra.mxu0 0.0
    %1319 = vmatprep.subr.mxu0 0.0
    %1320 = vmatpush1.xpose.msra.mxu0 0.0
    %1321 = vmatprep.subr.mxu0 0.0
    %1322 = vmatpush1.xpose.msra.mxu0 0.0
    %1323 = vmatprep.subr.mxu0 0.0
    %1324 = vmatpush1.xpose.msra.mxu0 0.0
    %1325 = vmatprep.subr.mxu0 0.0
    %1326 = vmatpush1.xpose.msra.mxu0 0.0
    %1327 = vmatprep.subr.mxu0 0.0
    %1328 = vmatpush1.xpose.msra.mxu0 0.0
    %1329 = vmatprep.subr.mxu0 0.0
    %1330 = vmatpush1.xpose.msra.mxu0 0.0
    %1331 = vmatprep.subr.mxu0 0.0
    %1332 = vmatpush1.xpose.msra.mxu0 0.0
    %1333 = vmatprep.subr.mxu0 0.0
    %1334 = vmatpush1.xpose.msra.mxu0 0.0
    %1335 = vmatprep.subr.mxu0 0.0
    %1336 = vmatpush1.xpose.msra.mxu0 0.0
    %1337 = vmatprep.subr.mxu0 0.0
    %1338 = vmatpush1.xpose.msra.mxu0 0.0
    %1339 = vmatprep.subr.mxu0 0.0
    %1340 = vmatpush1.xpose.msra.mxu0 0.0
    %1341 = vmatprep.subr.mxu0 0.0
    %1342 = vmatpush1.xpose.msra.mxu0 0.0
    %1343 = vmatprep.subr.mxu0 0.0
    %1344 = vmatpush1.xpose.msra.mxu0 0.0
    %1345 = vmatprep.subr.mxu0 0.0
    %1346 = vmatpush1.xpose.msra.mxu0 0.0
    %1347 = vmatprep.subr.mxu0 0.0
    %1348 = vmatpush1.xpose.msra.mxu0 0.0
    %1349 = vmatprep.subr.mxu0 0.0
    %1350 = vmatpush1.xpose.msra.mxu0 0.0
    %1351 = vmatprep.subr.mxu0 0.0
    %1352 = vmatpush1.xpose.msra.mxu0 0.0
    %1353 = vmatprep.subr.mxu0 0.0
    %1354 = vmatpush1.xpose.msra.mxu0 0.0
    %1355 = vmatprep.subr.mxu0 0.0
    %1356 = vmatpush1.xpose.msra.mxu0 0.0
    %1357 = vmatprep.subr.mxu0 0.0
    %1358 = vmatpush1.xpose.msra.mxu0 0.0
    %1359 = vmatprep.subr.mxu0 0.0
    %1360 = vmatpush1.xpose.msra.mxu0 0.0
    %1361 = vmatprep.subr.mxu0 0.0
    %1362 = vmatpush1.xpose.msra.mxu0 0.0
    %1363 = vmatprep.subr.mxu0 0.0
    %1364 = vmatpush1.xpose.msra.mxu0 0.0
    %1365 = vmatprep.subr.mxu0 0.0
    %1366 = vmatpush1.xpose.msra.mxu0 0.0
    %1367 = vmatprep.mubr.f32.mxu0 0.0
    %1368 = vmatmul.mubr.f32.gmra.mrb[0].mxu0 %v1299
    %v1369 = vpop.f32.mrb[0].mxu0
    %v1370 = vadd.f32 0.0, %v1369
    %v1371 = vpop.f32.mrb[0].mxu0
    %1372 = vdwg.mxu0
    %v1373 = vmul.f32 %v1370, 0.35355338
    %v1374 = vsel %vm138, %v1373, -inf
    %1375 = vmax.xlane.f32.xlu0 %v1374
    %v1376 = vpop.xlane.xlu0 %1375
    %v1377 = vsub.f32 %v1373, %v1376
    %v1378 = vmul.f32 %v1377, 1.442695
    %v1379 = vpow.pop %v1378
    %v1380 = vsel %vm138, %v1379, 0.0
    %1381 = vadd.xlane.f32.xlu0 %v1380
    %v1382 = vpop.xlane.xlu0 %1381
    %v1383 = vrcp.pop %v1382
    %v1384 = vmul.f32 %v1379, %v1383
    %v1386 = vsel %vm138, %v1384, 0
    %1388 = vmatprep.subr.mxu0 0.0
    %1389 = vmatpush1.msra.mxu0 %v136
    %1390 = vmatprep.subr.mxu0 0.0
    %1391 = vmatpush1.msra.mxu0 0.0
    %1392 = vmatprep.subr.mxu0 0.0
    %1393 = vmatpush1.msra.mxu0 0.0
    %1394 = vmatprep.subr.mxu0 0.0
    %1395 = vmatpush1.msra.mxu0 0.0
    %1396 = vmatprep.subr.mxu0 0.0
    %1397 = vmatpush1.msra.mxu0 0.0
    %1398 = vmatprep.subr.mxu0 0.0
    %1399 = vmatpush1.msra.mxu0 0.0
    %1400 = vmatprep.subr.mxu0 0.0
    %1401 = vmatpush1.msra.mxu0 0.0
    %1402 = vmatprep.subr.mxu0 0.0
    %1403 = vmatpush1.msra.mxu0 0.0
    %1404 = vmatprep.subr.mxu0 0.0
    %1405 = vmatpush1.msra.mxu0 0.0
    %1406 = vmatprep.subr.mxu0 0.0
    %1407 = vmatpush1.msra.mxu0 0.0
    %1408 = vmatprep.subr.mxu0 0.0
    %1409 = vmatpush1.msra.mxu0 0.0
    %1410 = vmatprep.subr.mxu0 0.0
    %1411 = vmatpush1.msra.mxu0 0.0
    %1412 = vmatprep.subr.mxu0 0.0
    %1413 = vmatpush1.msra.mxu0 0.0
    %1414 = vmatprep.subr.mxu0 0.0
    %1415 = vmatpush1.msra.mxu0 0.0
    %1416 = vmatprep.subr.mxu0 0.0
    %1417 = vmatpush1.msra.mxu0 0.0
    %1418 = vmatprep.subr.mxu0 0.0
    %1419 = vmatpush1.msra.mxu0 0.0
    %1420 = vmatprep.subr.mxu0 0.0
    %1421 = vmatpush1.msra.mxu0 0.0
    %1422 = vmatprep.subr.mxu0 0.0
    %1423 = vmatpush1.msra.mxu0 0.0
    %1424 = vmatprep.subr.mxu0 0.0
    %1425 = vmatpush1.msra.mxu0 0.0
    %1426 = vmatprep.subr.mxu0 0.0
    %1427 = vmatpush1.msra.mxu0 0.0
    %1428 = vmatprep.subr.mxu0 0.0
    %1429 = vmatpush1.msra.mxu0 0.0
    %1430 = vmatprep.subr.mxu0 0.0
    %1431 = vmatpush1.msra.mxu0 0.0
    %1432 = vmatprep.subr.mxu0 0.0
    %1433 = vmatpush1.msra.mxu0 0.0
    %1434 = vmatprep.subr.mxu0 0.0
    %1435 = vmatpush1.msra.mxu0 0.0
    %1436 = vmatprep.subr.mxu0 0.0
    %1437 = vmatpush1.msra.mxu0 0.0
    %1438 = vmatprep.subr.mxu0 0.0
    %1439 = vmatpush1.msra.mxu0 0.0
    %1440 = vmatprep.subr.mxu0 0.0
    %1441 = vmatpush1.msra.mxu0 0.0
    %1442 = vmatprep.subr.mxu0 0.0
    %1443 = vmatpush1.msra.mxu0 0.0
    %1444 = vmatprep.subr.mxu0 0.0
    %1445 = vmatpush1.msra.mxu0 0.0
    %1446 = vmatprep.subr.mxu0 0.0
    %1447 = vmatpush1.msra.mxu0 0.0
    %1448 = vmatprep.subr.mxu0 0.0
    %1449 = vmatpush1.msra.mxu0 0.0
    %1450 = vmatprep.subr.mxu0 0.0
    %1451 = vmatpush1.msra.mxu0 0.0
    %1452 = vmatprep.mubr.f32.mxu0 0.0
    %1453 = vmatmul.mubr.f32.gmra.mrb[0].mxu0 %v1386
    %v1454 = vpop.f32.mrb[0].mxu0
    %v1455 = vadd.f32 0.0, %v1454
    %v1456 = vpop.f32.mrb[0].mxu0
    %1457 = vdwg.mxu0
    %v1458 = vadd.f32 %v1294, %v1455
    %v1460 = vlaneseq
    %v1461 = vshrl.u32 %v1460, 7
    %v1462 = vsub.s32 0, %v1461
    %v1463 = vrot.slane %v45, %v1462
    %v1465 = vadd.f32 %v798, %v1463
    %v1466 = vadd.f32 %v1458, %v1463
    %1467 = vst.msk [vmem:[#allocation7] sm:$0xff] %vm54, %v1465
    %1468 = vst.msk [vmem:[#allocation7 + $0x8] sm:$0xff] %vm54, %v1466
    // Predicated region
    $region22: #{text_att_val_mha.1} parent=1 // pred_check
      _
    $region23: #{text_att_val_mha.1} parent=1 // pred_check_branch
      %1470 = sbr.rel (0) target = $region25
    $region24: #{text_att_val_mha.1} parent=1 // pred_region
      %s1472 = ssub.s32 256, 256
      %1473 = vsyncadd [#allocation4], %s1472
      %s1474 = sshll.u32 [#allocation7], 4
      %s1475 = int_to_ptr.vmem [resolvable:$true] %s1474
      %1480 = dma.vmem_to_hbm [thread:$0]  %s1475, 256, %s3, [#allocation4], 128, 128, 8
    $region25: #{text_att_val_mha.1} parent=1 // pred_fallthru
      _
    // Predicated region
    $region26: #{text_att_val_mha.1} parent=1 // pred_check
      _
    $region27: #{text_att_val_mha.1} parent=1 // pred_check_branch
      %1482 = sbr.rel (0) target = $region29
    $region28: #{text_att_val_mha.1} parent=1 // pred_region
      %1483 = dma.done [#allocation4], 256
    $region29: #{text_att_val_mha.1} parent=1 // pred_fallthru
      _
    %1484 = vsyncpa [#allocation3], 1
    %1485 = vsyncpa [#allocation6], 1
    %1486 = vsyncpa [#allocation4], 1

</llo_original>
